<compile_context>
chip_gen: v7x
topology: tpu7x:2x2x1
jax: 0.10.0
libtpu: 0.0.40
codegen_flags: <defaults>
</compile_context>

<pallas_src>
import math
from functools import partial

import jax
import jax.numpy as jnp
from jax.experimental import pallas as pl
from jax.experimental.pallas import tpu as pltpu


def _cdiv(a, b):
    return -(-a // b)


def _softmax(x, axis):
    m = jnp.max(x, axis=axis, keepdims=True)
    e = jnp.exp(x - m)
    return e * pl.reciprocal(jnp.sum(e, axis=axis, keepdims=True), approx=False)


def _layer_norm(x, g, b, eps=1e-5):
    mu = jnp.mean(x, axis=-1, keepdims=True)
    c = x - mu
    var = jnp.mean(c * c, axis=-1, keepdims=True)
    return c * jax.lax.rsqrt(var + eps) * g + b


# -----------------------------------------------------------------------------
# Fused kernel body for one (batch-tile, layer) grid step.
# -----------------------------------------------------------------------------
def _vcf_kernel(x_ref, wqk_ref, wvo_ref, ln1_g_ref, ln1_b_ref,
                w1_ref, b1_ref, w2_ref, b2_ref, ln2_g_ref, ln2_b_ref,
                wc_ref, bc_ref, lam_ref,
                cls_ref, feat_ref,
                h_ref, *, softmax_over_seq):
    l = pl.program_id(1)
    depth = pl.num_programs(1)
    bt, n, d = h_ref.shape

    @pl.when(l == 0)
    def _():                                    # load this batch tile's input
        h_ref[...] = x_ref[...].astype(jnp.float32)

    h = h_ref[...]                              # (Bt, N, D) f32, VMEM-resident
    hb2 = h.astype(jnp.bfloat16).reshape(bt * n, d)   # stacked rows for the MXU

    # --- differential attention --------------------------------------------
    # Four lane-aligned (D, D) projections; 1/sqrt(D) is folded into Q weights
    # and wv @ wo is folded into one matrix at init.
    def proj(j):
        return jnp.dot(hb2, wqk_ref[j], preferred_element_type=jnp.float32)

    q1 = proj(0).astype(jnp.bfloat16).reshape(bt, n, d)
    k1 = proj(1).astype(jnp.bfloat16).reshape(bt, n, d)
    q2 = proj(2).astype(jnp.bfloat16).reshape(bt, n, d)
    k2 = proj(3).astype(jnp.bfloat16).reshape(bt, n, d)
    v = jnp.dot(hb2, wvo_ref[...], preferred_element_type=jnp.float32)
    v = v.astype(jnp.bfloat16).reshape(bt, n, d)

    # TODO(synk): for N beyond ~1-2k the NxN scores should be flash-tiled
    # (online softmax over k-blocks) to bound attention scratch to O(N*tile).
    s1 = jnp.einsum('bqd,bkd->bqk', q1, k1, preferred_element_type=jnp.float32)
    s2 = jnp.einsum('bqd,bkd->bqk', q2, k2, preferred_element_type=jnp.float32)

    attn = _softmax(s1, axis=-1) - lam_ref[l] * _softmax(s2, axis=-1)
    ctx = jnp.einsum('bqk,bkd->bqd', attn.astype(jnp.bfloat16), v,
                     preferred_element_type=jnp.float32)

    # --- residual + LayerNorm 1 ---------------------------------------------
    h1 = _layer_norm(h + ctx, ln1_g_ref[...], ln1_b_ref[...])

    # --- position-wise FFN ----------------------------------------------------
    t = jnp.dot(h1.astype(jnp.bfloat16).reshape(bt * n, d), w1_ref[...],
                preferred_element_type=jnp.float32) + b1_ref[...]
    t = jnp.maximum(t, 0.0)
    f = jnp.dot(t.astype(jnp.bfloat16), w2_ref[...],
                preferred_element_type=jnp.float32) + b2_ref[...]

    # --- residual + LayerNorm 2 ----------------------------------------------
    h_new = _layer_norm(h1 + f.reshape(bt, n, d), ln2_g_ref[...], ln2_b_ref[...])
    h_ref[...] = h_new

    # --- cluster head, only on the final layer ---------------------------------
    @pl.when(l == depth - 1)
    def _():
        feat_ref[...] = h_new
        logits = jnp.dot(h_new.astype(jnp.bfloat16).reshape(bt * n, d),
                         wc_ref[...], preferred_element_type=jnp.float32)
        logits = (logits + bc_ref[...]).reshape(bt, n, -1)
        # PyTorch Softmax(dim=1): class axis for 2-D input, sequence axis for 3-D.
        cls_ref[...] = _softmax(logits, axis=1 if softmax_over_seq else -1)


# -----------------------------------------------------------------------------
# Wrapper: one pallas_call; weights streamed per layer, batch tiled in parallel.
# -----------------------------------------------------------------------------
def _vcf_pallas(params, x3d, class_num, softmax_over_seq):
    B, N, D = x3d.shape
    depth = params["wqk"].shape[0]
    H = params["w1"].shape[-1]
    CLS_PAD = params["wc"].shape[-1]

    # Batch stacking: give the MXU >= ~256 rows per matmul when N is small.
    Bt = max(1, min(B, _cdiv(256, N)))
    B_pad = _cdiv(B, Bt) * Bt
    if B_pad != B:
        x3d = jnp.pad(x3d, ((0, B_pad - B), (0, 0), (0, 0)))

    grid = (B_pad // Bt, depth)

    def wspec(shape):               # per-layer weight, streamed along the l axis
        nd = len(shape) - 1
        return pl.BlockSpec((None,) + tuple(shape[1:]),
                            lambda b, l: (l,) + (0,) * nd)

    def cspec(shape):               # grid-constant weight
        nd = len(shape)
        return pl.BlockSpec(tuple(shape), lambda b, l: (0,) * nd)

    in_specs = [
        pl.BlockSpec((Bt, N, D), lambda b, l: (b, 0, 0)),       # x (per batch tile)
        wspec(params["wqk"].shape),     # (depth, 4, D, D) bf16
        wspec(params["wvo"].shape),     # (depth, D, D)    bf16
        wspec(params["ln1_g"].shape),   # (depth, 1, D)    f32
        wspec(params["ln1_b"].shape),
        wspec(params["w1"].shape),      # (depth, D, H)    bf16
        wspec(params["b1"].shape),      # (depth, 1, H)    f32
        wspec(params["w2"].shape),      # (depth, H, D)    bf16
        wspec(params["b2"].shape),      # (depth, 1, D)    f32
        wspec(params["ln2_g"].shape),
        wspec(params["ln2_b"].shape),
        cspec(params["wc"].shape),      # (D, CLS_PAD)     bf16
        cspec(params["bc"].shape),      # (1, CLS_PAD)     f32
        pl.BlockSpec(memory_space=pltpu.MemorySpace.SMEM),      # lam scalar table
    ]
    out_specs = (
        pl.BlockSpec((Bt, N, CLS_PAD), lambda b, l: (b, 0, 0)),
        pl.BlockSpec((Bt, N, D), lambda b, l: (b, 0, 0)),
    )
    out_shape = (
        jax.ShapeDtypeStruct((B_pad, N, CLS_PAD), jnp.float32),
        jax.ShapeDtypeStruct((B_pad, N, D), jnp.float32),
    )

    # Explicit VMEM budget (defaults are only 16/32 MiB): double-buffered blocks
    # + persistent activation scratch + working set; floored at 32 MiB, capped at
    # v7x's 64 MiB physical VMEM.
    def nbytes(shape, dtype):
        return math.prod(shape) * jnp.dtype(dtype).itemsize

    layer_bytes = sum(nbytes(params[k].shape[1:], params[k].dtype)
                      for k in ("wqk", "wvo", "ln1_g", "ln1_b", "w1", "b1",
                                "w2", "b2", "ln2_g", "ln2_b"))
    const_bytes = (nbytes(params["wc"].shape, params["wc"].dtype)
                   + nbytes(params["bc"].shape, params["bc"].dtype))
    io_bytes = Bt * N * (2 * D + CLS_PAD) * 4
    work_bytes = Bt * N * max(N, 4 * D, H, CLS_PAD) * 4 * 8
    est = 2 * (layer_bytes + const_bytes + io_bytes) + Bt * N * D * 4 + work_bytes
    vmem_limit = int(min(64 << 20, max(32 << 20, est)))

    kernel = partial(_vcf_kernel, softmax_over_seq=softmax_over_seq)
    cls_pad, feat_pad = pl.pallas_call(
        kernel,
        grid=grid,
        in_specs=in_specs,
        out_specs=out_specs,
        out_shape=out_shape,
        scratch_shapes=[pltpu.VMEM((Bt, N, D), jnp.float32)],   # carried activation
        compiler_params=pltpu.CompilerParams(
            dimension_semantics=("parallel", "arbitrary"),
            vmem_limit_bytes=vmem_limit),
    )(x3d, params["wqk"], params["wvo"], params["ln1_g"], params["ln1_b"],
      params["w1"], params["b1"], params["w2"], params["b2"],
      params["ln2_g"], params["ln2_b"], params["wc"], params["bc"],
      params["lam"])

    # Drop batch padding and class-lane padding in the wrapper.
    return cls_pad[:B, :, :class_num], feat_pad[:B]


# -----------------------------------------------------------------------------
# Parameter construction (deterministic, in-script).
# -----------------------------------------------------------------------------
def init_vcf_params(key, in_feature_dim, class_num, depth, ffn_mult=4):
    d = in_feature_dim
    h = ffn_mult * d
    cls_pad = max(128, _cdiv(class_num, 128) * 128)

    keys = jax.random.split(key, depth * 8 + 1)
    w_scale = 1.0 / math.sqrt(d)
    attn_scale = 1.0 / math.sqrt(d)

    def nrm(k, shape, scale):
        return scale * jax.random.normal(k, shape, dtype=jnp.float32)

    wqk, wvo, w1, w2 = [], [], [], []
    for li in range(depth):
        ks = keys[li * 8:(li + 1) * 8]
        wq1 = nrm(ks[0], (d, d), w_scale)
        wk1 = nrm(ks[1], (d, d), w_scale)
        wq2 = nrm(ks[2], (d, d), w_scale)
        wk2 = nrm(ks[3], (d, d), w_scale)
        wv = nrm(ks[4], (d, d), w_scale)
        wo = nrm(ks[5], (d, d), w_scale)
        # fold 1/sqrt(d) into Q; keep [q1,k1,q2,k2] on a leading axis so the
        # kernel never takes a non-128-aligned lane slice; fold wv @ wo.
        wqk.append(jnp.stack([wq1 * attn_scale, wk1, wq2 * attn_scale, wk2], 0))
        wvo.append(wv @ wo)
        w1.append(nrm(ks[6], (d, h), w_scale))
        w2.append(nrm(ks[7], (h, d), 1.0 / math.sqrt(h)))

    # cluster head, lane-padded to a 128-multiple class dim; padding columns are
    # masked with a -1e9 bias and sliced off in the wrapper.
    wc = jnp.zeros((d, cls_pad), jnp.float32)
    wc = wc.at[:, :class_num].set(nrm(keys[-1], (d, class_num), w_scale))
    bc = jnp.full((1, cls_pad), -1e9, jnp.float32)
    bc = bc.at[:, :class_num].set(0.0)

    return {
        "wqk": jnp.stack(wqk).astype(jnp.bfloat16),    # (depth, 4, d, d)
        "wvo": jnp.stack(wvo).astype(jnp.bfloat16),    # (depth, d, d)
        "ln1_g": jnp.ones((depth, 1, d), jnp.float32),
        "ln1_b": jnp.zeros((depth, 1, d), jnp.float32),
        "w1": jnp.stack(w1).astype(jnp.bfloat16),      # (depth, d, h)
        "b1": jnp.zeros((depth, 1, h), jnp.float32),
        "w2": jnp.stack(w2).astype(jnp.bfloat16),      # (depth, h, d)
        "b2": jnp.zeros((depth, 1, d), jnp.float32),
        "ln2_g": jnp.ones((depth, 1, d), jnp.float32),
        "ln2_b": jnp.zeros((depth, 1, d), jnp.float32),
        "lam": jnp.full((depth,), 0.5, jnp.float32),   # SMEM scalar table
        "wc": wc.astype(jnp.bfloat16),                 # (d, cls_pad)
        "bc": bc,                                      # (1, cls_pad)
    }


# -----------------------------------------------------------------------------
# VCF forward (mirrors the PyTorch module's forward).
# -----------------------------------------------------------------------------
def vcf_forward(params, C, class_num):
    if C.ndim <= 2:
        x = C.astype(jnp.float32)[None]                       # unsqueeze(0)
        cls, feat = _vcf_pallas(params, x, class_num, softmax_over_seq=False)
        return cls[0], feat[0]                                # squeeze(0)
    x = C.astype(jnp.float32)
    # TODO(synk): on v7x with B == 1 only one of the two TensorCores is used.
    # 3-D input: nn.Softmax(dim=1) normalizes over the sequence axis N.
    return _vcf_pallas(params, x, class_num, softmax_over_seq=True)


if __name__ == "__main__":
    N, D, CLASS_NUM, DEPTH = 8, 32, 4, 2

    key = jax.random.PRNGKey(0)
    k_param, k_data = jax.random.split(key)
    params = init_vcf_params(k_param, D, CLASS_NUM, DEPTH)

    # 2-D path (the unsqueeze/squeeze branch of VCF.forward)
    C = jax.random.normal(k_data, (N, D), dtype=jnp.float32)
    cls, feat = vcf_forward(params, C, CLASS_NUM)
    jax.block_until_ready((cls, feat))
    assert cls.shape == (N, CLASS_NUM)
    assert feat.shape == (N, D)
    assert jnp.allclose(jnp.sum(cls, axis=1), 1.0, atol=1e-4)
    assert bool(jnp.all(jnp.isfinite(feat)))

    # batched 3-D path: grid=(batch_tiles, depth); Softmax(dim=1) over the N axis
    B = 2
    C3 = jax.random.normal(k_data, (B, N, D), dtype=jnp.float32)
    cls3, feat3 = vcf_forward(params, C3, CLASS_NUM)
    jax.block_until_ready((cls3, feat3))
    assert cls3.shape == (B, N, CLASS_NUM)
    assert feat3.shape == (B, N, D)
    assert jnp.allclose(jnp.sum(cls3, axis=1), 1.0, atol=1e-4)
    assert bool(jnp.all(jnp.isfinite(feat3)))

    print("KERNEL_OK")
</pallas_src>

<mosaic_0001>
module attributes {stable_mosaic.version = 11 : i64} {
  func.func @_vcf_kernel(%arg0: i32, %arg1: i32, %arg2: memref<1x8x32xf32, #tpu.memory_space<vmem>>, %arg3: memref<1x4x32x32xbf16, #tpu.memory_space<vmem>>, %arg4: memref<1x32x32xbf16, #tpu.memory_space<vmem>>, %arg5: memref<1x1x32xf32, #tpu.memory_space<vmem>>, %arg6: memref<1x1x32xf32, #tpu.memory_space<vmem>>, %arg7: memref<1x32x128xbf16, #tpu.memory_space<vmem>>, %arg8: memref<1x1x128xf32, #tpu.memory_space<vmem>>, %arg9: memref<1x128x32xbf16, #tpu.memory_space<vmem>>, %arg10: memref<1x1x32xf32, #tpu.memory_space<vmem>>, %arg11: memref<1x1x32xf32, #tpu.memory_space<vmem>>, %arg12: memref<1x1x32xf32, #tpu.memory_space<vmem>>, %arg13: memref<32x128xbf16, #tpu.memory_space<vmem>>, %arg14: memref<1x128xf32, #tpu.memory_space<vmem>>, %arg15: memref<2xf32, #tpu.memory_space<smem>>, %arg16: memref<1x8x128xf32, #tpu.memory_space<vmem>>, %arg17: memref<1x8x32xf32, #tpu.memory_space<vmem>>, %arg18: memref<1x8x32xf32, #tpu.memory_space<vmem>>) attributes {dimension_semantics = [#tpu.dimension_semantics<parallel>, #tpu.dimension_semantics<arbitrary>], iteration_bounds = array<i64: 1, 2>, scalar_prefetch = 0 : i64, scratch_operands = 1 : i64, tpu.core_type = #tpu.core_type<tc>, window_params = [{transform_indices = @transform_0, window_bounds = array<i64: 1, 8, 32>}, {transform_indices = @transform_1, window_bounds = array<i64: 1, 4, 32, 32>}, {transform_indices = @transform_2, window_bounds = array<i64: 1, 32, 32>}, {transform_indices = @transform_3, window_bounds = array<i64: 1, 1, 32>}, {transform_indices = @transform_4, window_bounds = array<i64: 1, 1, 32>}, {transform_indices = @transform_5, window_bounds = array<i64: 1, 32, 128>}, {transform_indices = @transform_6, window_bounds = array<i64: 1, 1, 128>}, {transform_indices = @transform_7, window_bounds = array<i64: 1, 128, 32>}, {transform_indices = @transform_8, window_bounds = array<i64: 1, 1, 32>}, {transform_indices = @transform_9, window_bounds = array<i64: 1, 1, 32>}, {transform_indices = @transform_10, window_bounds = array<i64: 1, 1, 32>}, {pipeline_mode = #tpu.pipeline_mode<synchronous>, transform_indices = @transform_11, window_bounds = array<i64: 32, 128>}, {pipeline_mode = #tpu.pipeline_mode<synchronous>, transform_indices = @transform_12, window_bounds = array<i64: 1, 128>}, {transform_indices = @transform_13, window_bounds = array<i64: 2>}, {transform_indices = @transform_14, window_bounds = array<i64: 1, 8, 128>}, {transform_indices = @transform_15, window_bounds = array<i64: 1, 8, 32>}]} {
    %c0_i32 = arith.constant 0 : i32
    %0 = arith.cmpi eq, %arg1, %c0_i32 : i32
    %1 = arith.extui %0 : i1 to i32
    %c0_i32_0 = arith.constant 0 : i32
    %2 = arith.cmpi ne, %1, %c0_i32_0 : i32
    scf.if %2 {
      %c0_71 = arith.constant 0 : index
      %c0_72 = arith.constant 0 : index
      %c0_73 = arith.constant 0 : index
      %138 = vector.load %arg2[%c0_71, %c0_72, %c0_73] : memref<1x8x32xf32, #tpu.memory_space<vmem>>, vector<1x8x32xf32>
      %c0_74 = arith.constant 0 : index
      %c0_75 = arith.constant 0 : index
      %c0_76 = arith.constant 0 : index
      %139 = vector.load %arg18[%c0_74, %c0_75, %c0_76] : memref<1x8x32xf32, #tpu.memory_space<vmem>>, vector<1x8x32xf32>
      tpu.vector_store %arg18[%c0_74, %c0_75, %c0_76], %138 {strides = array<i32>} : memref<1x8x32xf32, #tpu.memory_space<vmem>>, vector<1x8x32xf32>,
    } else {
    }
    %c0 = arith.constant 0 : index
    %c0_1 = arith.constant 0 : index
    %c0_2 = arith.constant 0 : index
    %3 = vector.load %arg18[%c0, %c0_1, %c0_2] : memref<1x8x32xf32, #tpu.memory_space<vmem>>, vector<1x8x32xf32>
    %4 = arith.truncf %3 : vector<1x8x32xf32> to vector<1x8x32xbf16>
    %5 = vector.shape_cast %4 : vector<1x8x32xbf16> to vector<8x32xbf16>
    %c0_3 = arith.constant 0 : index
    %c0_4 = arith.constant 0 : index
    %c0_5 = arith.constant 0 : index
    %c0_6 = arith.constant 0 : index
    %6 = vector.load %arg3[%c0_3, %c0_4, %c0_5, %c0_6] : memref<1x4x32x32xbf16, #tpu.memory_space<vmem>>, vector<1x1x32x32xbf16>
    %7 = vector.shape_cast %6 : vector<1x1x32x32xbf16> to vector<32x32xbf16>
    %cst = arith.constant dense<0.000000e+00> : vector<8x32xf32>
    %8 = tpu.matmul %5, %7, %cst {dimension_numbers = #tpu.dot_dimension_numbers<[1], [0], [0], [1], [0, 0, 1, 1], [], []>} : vector<8x32xbf16>, vector<32x32xbf16>, vector<8x32xf32> -> vector<8x32xf32>
    %9 = arith.truncf %8 : vector<8x32xf32> to vector<8x32xbf16>
    %10 = vector.shape_cast %9 : vector<8x32xbf16> to vector<1x8x32xbf16>
    %c0_7 = arith.constant 0 : index
    %c1 = arith.constant 1 : index
    %c0_8 = arith.constant 0 : index
    %c0_9 = arith.constant 0 : index
    %11 = vector.load %arg3[%c0_7, %c1, %c0_8, %c0_9] : memref<1x4x32x32xbf16, #tpu.memory_space<vmem>>, vector<1x1x32x32xbf16>
    %12 = vector.shape_cast %11 : vector<1x1x32x32xbf16> to vector<32x32xbf16>
    %cst_10 = arith.constant dense<0.000000e+00> : vector<8x32xf32>
    %13 = tpu.matmul %5, %12, %cst_10 {dimension_numbers = #tpu.dot_dimension_numbers<[1], [0], [0], [1], [0, 0, 1, 1], [], []>} : vector<8x32xbf16>, vector<32x32xbf16>, vector<8x32xf32> -> vector<8x32xf32>
    %14 = arith.truncf %13 : vector<8x32xf32> to vector<8x32xbf16>
    %15 = vector.shape_cast %14 : vector<8x32xbf16> to vector<1x8x32xbf16>
    %c0_11 = arith.constant 0 : index
    %c2 = arith.constant 2 : index
    %c0_12 = arith.constant 0 : index
    %c0_13 = arith.constant 0 : index
    %16 = vector.load %arg3[%c0_11, %c2, %c0_12, %c0_13] : memref<1x4x32x32xbf16, #tpu.memory_space<vmem>>, vector<1x1x32x32xbf16>
    %17 = vector.shape_cast %16 : vector<1x1x32x32xbf16> to vector<32x32xbf16>
    %cst_14 = arith.constant dense<0.000000e+00> : vector<8x32xf32>
    %18 = tpu.matmul %5, %17, %cst_14 {dimension_numbers = #tpu.dot_dimension_numbers<[1], [0], [0], [1], [0, 0, 1, 1], [], []>} : vector<8x32xbf16>, vector<32x32xbf16>, vector<8x32xf32> -> vector<8x32xf32>
    %19 = arith.truncf %18 : vector<8x32xf32> to vector<8x32xbf16>
    %20 = vector.shape_cast %19 : vector<8x32xbf16> to vector<1x8x32xbf16>
    %c0_15 = arith.constant 0 : index
    %c3 = arith.constant 3 : index
    %c0_16 = arith.constant 0 : index
    %c0_17 = arith.constant 0 : index
    %21 = vector.load %arg3[%c0_15, %c3, %c0_16, %c0_17] : memref<1x4x32x32xbf16, #tpu.memory_space<vmem>>, vector<1x1x32x32xbf16>
    %22 = vector.shape_cast %21 : vector<1x1x32x32xbf16> to vector<32x32xbf16>
    %cst_18 = arith.constant dense<0.000000e+00> : vector<8x32xf32>
    %23 = tpu.matmul %5, %22, %cst_18 {dimension_numbers = #tpu.dot_dimension_numbers<[1], [0], [0], [1], [0, 0, 1, 1], [], []>} : vector<8x32xbf16>, vector<32x32xbf16>, vector<8x32xf32> -> vector<8x32xf32>
    %24 = arith.truncf %23 : vector<8x32xf32> to vector<8x32xbf16>
    %25 = vector.shape_cast %24 : vector<8x32xbf16> to vector<1x8x32xbf16>
    %c0_19 = arith.constant 0 : index
    %c0_20 = arith.constant 0 : index
    %c0_21 = arith.constant 0 : index
    %26 = vector.load %arg4[%c0_19, %c0_20, %c0_21] : memref<1x32x32xbf16, #tpu.memory_space<vmem>>, vector<1x32x32xbf16>
    %27 = vector.shape_cast %26 : vector<1x32x32xbf16> to vector<32x32xbf16>
    %cst_22 = arith.constant dense<0.000000e+00> : vector<8x32xf32>
    %28 = tpu.matmul %5, %27, %cst_22 {dimension_numbers = #tpu.dot_dimension_numbers<[1], [0], [0], [1], [0, 0, 1, 1], [], []>} : vector<8x32xbf16>, vector<32x32xbf16>, vector<8x32xf32> -> vector<8x32xf32>
    %29 = arith.truncf %28 : vector<8x32xf32> to vector<8x32xbf16>
    %30 = vector.shape_cast %29 : vector<8x32xbf16> to vector<1x8x32xbf16>
    "tpu.trace_start"() <{level = 10 : i32, message = "bqd,bkd->bqk"}> : () -> ()
    %cst_23 = arith.constant dense<0.000000e+00> : vector<1x8x8xf32>
    %31 = tpu.matmul %10, %15, %cst_23 {dimension_numbers = #tpu.dot_dimension_numbers<[2], [2], [1], [1], [0, 0, 0, 1, 1, 1], [0], [0]>} : vector<1x8x32xbf16>, vector<1x8x32xbf16>, vector<1x8x8xf32> -> vector<1x8x8xf32>
    %cst_24 = arith.constant dense<0.000000e+00> : vector<1x8x8xf32>
    %32 = tpu.matmul %20, %25, %cst_24 {dimension_numbers = #tpu.dot_dimension_numbers<[2], [2], [1], [1], [0, 0, 0, 1, 1, 1], [0], [0]>} : vector<1x8x32xbf16>, vector<1x8x32xbf16>, vector<1x8x8xf32> -> vector<1x8x8xf32>
    "tpu.trace_stop"() : () -> ()
    %cst_25 = arith.constant dense<0xFF800000> : vector<1x8xf32>
    %33 = vector.multi_reduction <maximumf>, %31, %cst_25 [2] : vector<1x8x8xf32> to vector<1x8xf32>
    %34 = vector.shape_cast %33 : vector<1x8xf32> to vector<1x8x1xf32>
    %35 = vector.broadcast %34 : vector<1x8x1xf32> to vector<1x8x8xf32>
    %36 = arith.subf %31, %35 : vector<1x8x8xf32>
    %37 = math.exp %36 : vector<1x8x8xf32>
    %cst_26 = arith.constant dense<0.000000e+00> : vector<1x8xf32>
    %38 = vector.multi_reduction <add>, %37, %cst_26 [2] : vector<1x8x8xf32> to vector<1x8xf32>
    %39 = vector.shape_cast %38 : vector<1x8xf32> to vector<1x8x1xf32>
    %40 = tpu.reciprocal %39 : vector<1x8x1xf32> -> vector<1x8x1xf32>
    %41 = vector.broadcast %40 : vector<1x8x1xf32> to vector<1x8x8xf32>
    %42 = arith.mulf %37, %41 : vector<1x8x8xf32>
    %43 = arith.index_cast %arg1 : i32 to index
    %44 = memref.load %arg15[%43] : memref<2xf32, #tpu.memory_space<smem>>
    %cst_27 = arith.constant dense<0xFF800000> : vector<1x8xf32>
    %45 = vector.multi_reduction <maximumf>, %32, %cst_27 [2] : vector<1x8x8xf32> to vector<1x8xf32>
    %46 = vector.shape_cast %45 : vector<1x8xf32> to vector<1x8x1xf32>
    %47 = vector.broadcast %46 : vector<1x8x1xf32> to vector<1x8x8xf32>
    %48 = arith.subf %32, %47 : vector<1x8x8xf32>
    %49 = math.exp %48 : vector<1x8x8xf32>
    %cst_28 = arith.constant dense<0.000000e+00> : vector<1x8xf32>
    %50 = vector.multi_reduction <add>, %49, %cst_28 [2] : vector<1x8x8xf32> to vector<1x8xf32>
    %51 = vector.shape_cast %50 : vector<1x8xf32> to vector<1x8x1xf32>
    %52 = tpu.reciprocal %51 : vector<1x8x1xf32> -> vector<1x8x1xf32>
    %53 = vector.broadcast %52 : vector<1x8x1xf32> to vector<1x8x8xf32>
    %54 = arith.mulf %49, %53 : vector<1x8x8xf32>
    %55 = vector.broadcast %44 : f32 to vector<1x8x8xf32>
    %56 = arith.mulf %55, %54 : vector<1x8x8xf32>
    %57 = arith.subf %42, %56 : vector<1x8x8xf32>
    %58 = arith.truncf %57 : vector<1x8x8xf32> to vector<1x8x8xbf16>
    "tpu.trace_start"() <{level = 10 : i32, message = "bqk,bkd->bqd"}> : () -> ()
    %cst_29 = arith.constant dense<0.000000e+00> : vector<1x8x32xf32>
    %59 = tpu.matmul %58, %30, %cst_29 {dimension_numbers = #tpu.dot_dimension_numbers<[2], [1], [1], [2], [0, 0, 0, 1, 1, 2], [0], [0]>} : vector<1x8x8xbf16>, vector<1x8x32xbf16>, vector<1x8x32xf32> -> vector<1x8x32xf32>
    "tpu.trace_stop"() : () -> ()
    %60 = arith.addf %3, %59 : vector<1x8x32xf32>
    %c0_30 = arith.constant 0 : index
    %c0_31 = arith.constant 0 : index
    %c0_32 = arith.constant 0 : index
    %61 = vector.load %arg5[%c0_30, %c0_31, %c0_32] : memref<1x1x32xf32, #tpu.memory_space<vmem>>, vector<1x1x32xf32>
    %62 = vector.shape_cast %61 : vector<1x1x32xf32> to vector<1x32xf32>
    %c0_33 = arith.constant 0 : index
    %c0_34 = arith.constant 0 : index
    %c0_35 = arith.constant 0 : index
    %63 = vector.load %arg6[%c0_33, %c0_34, %c0_35] : memref<1x1x32xf32, #tpu.memory_space<vmem>>, vector<1x1x32xf32>
    %64 = vector.shape_cast %63 : vector<1x1x32xf32> to vector<1x32xf32>
    %cst_36 = arith.constant dense<0.000000e+00> : vector<1x8xf32>
    %65 = vector.multi_reduction <add>, %60, %cst_36 [2] : vector<1x8x32xf32> to vector<1x8xf32>
    %66 = vector.shape_cast %65 : vector<1x8xf32> to vector<1x8x1xf32>
    %cst_37 = arith.constant 3.200000e+01 : f32
    %67 = vector.broadcast %cst_37 : f32 to vector<1x8x1xf32>
    %68 = arith.divf %66, %67 : vector<1x8x1xf32>
    %69 = vector.broadcast %68 : vector<1x8x1xf32> to vector<1x8x32xf32>
    %70 = arith.subf %60, %69 : vector<1x8x32xf32>
    %71 = arith.mulf %70, %70 : vector<1x8x32xf32>
    %cst_38 = arith.constant dense<0.000000e+00> : vector<1x8xf32>
    %72 = vector.multi_reduction <add>, %71, %cst_38 [2] : vector<1x8x32xf32> to vector<1x8xf32>
    %73 = vector.shape_cast %72 : vector<1x8xf32> to vector<1x8x1xf32>
    %cst_39 = arith.constant 3.200000e+01 : f32
    %74 = vector.broadcast %cst_39 : f32 to vector<1x8x1xf32>
    %75 = arith.divf %73, %74 : vector<1x8x1xf32>
    %cst_40 = arith.constant 9.99999974E-6 : f32
    %76 = vector.broadcast %cst_40 : f32 to vector<1x8x1xf32>
    %77 = arith.addf %75, %76 : vector<1x8x1xf32>
    %78 = math.rsqrt %77 : vector<1x8x1xf32>
    %79 = vector.broadcast %78 : vector<1x8x1xf32> to vector<1x8x32xf32>
    %80 = arith.mulf %70, %79 : vector<1x8x32xf32>
    %81 = vector.shape_cast %62 : vector<1x32xf32> to vector<1x1x32xf32>
    %82 = vector.broadcast %81 : vector<1x1x32xf32> to vector<1x8x32xf32>
    %83 = arith.mulf %80, %82 : vector<1x8x32xf32>
    %84 = vector.shape_cast %64 : vector<1x32xf32> to vector<1x1x32xf32>
    %85 = vector.broadcast %84 : vector<1x1x32xf32> to vector<1x8x32xf32>
    %86 = arith.addf %83, %85 : vector<1x8x32xf32>
    %87 = arith.truncf %86 : vector<1x8x32xf32> to vector<1x8x32xbf16>
    %88 = vector.shape_cast %87 : vector<1x8x32xbf16> to vector<8x32xbf16>
    %c0_41 = arith.constant 0 : index
    %c0_42 = arith.constant 0 : index
    %c0_43 = arith.constant 0 : index
    %89 = vector.load %arg7[%c0_41, %c0_42, %c0_43] : memref<1x32x128xbf16, #tpu.memory_space<vmem>>, vector<1x32x128xbf16>
    %90 = vector.shape_cast %89 : vector<1x32x128xbf16> to vector<32x128xbf16>
    %cst_44 = arith.constant dense<0.000000e+00> : vector<8x128xf32>
    %91 = tpu.matmul %88, %90, %cst_44 {dimension_numbers = #tpu.dot_dimension_numbers<[1], [0], [0], [1], [0, 0, 1, 1], [], []>} : vector<8x32xbf16>, vector<32x128xbf16>, vector<8x128xf32> -> vector<8x128xf32>
    %c0_45 = arith.constant 0 : index
    %c0_46 = arith.constant 0 : index
    %c0_47 = arith.constant 0 : index
    %92 = vector.load %arg8[%c0_45, %c0_46, %c0_47] : memref<1x1x128xf32, #tpu.memory_space<vmem>>, vector<1x1x128xf32>
    %93 = vector.shape_cast %92 : vector<1x1x128xf32> to vector<1x128xf32>
    %94 = vector.broadcast %93 : vector<1x128xf32> to vector<8x128xf32>
    %95 = arith.addf %91, %94 : vector<8x128xf32>
    %cst_48 = arith.constant 0.000000e+00 : f32
    %96 = vector.broadcast %cst_48 : f32 to vector<8x128xf32>
    %97 = arith.maximumf %95, %96 : vector<8x128xf32>
    %98 = arith.truncf %97 : vector<8x128xf32> to vector<8x128xbf16>
    %c0_49 = arith.constant 0 : index
    %c0_50 = arith.constant 0 : index
    %c0_51 = arith.constant 0 : index
    %99 = vector.load %arg9[%c0_49, %c0_50, %c0_51] : memref<1x128x32xbf16, #tpu.memory_space<vmem>>, vector<1x128x32xbf16>
    %100 = vector.shape_cast %99 : vector<1x128x32xbf16> to vector<128x32xbf16>
    %cst_52 = arith.constant dense<0.000000e+00> : vector<8x32xf32>
    %101 = tpu.matmul %98, %100, %cst_52 {dimension_numbers = #tpu.dot_dimension_numbers<[1], [0], [0], [1], [0, 0, 1, 1], [], []>} : vector<8x128xbf16>, vector<128x32xbf16>, vector<8x32xf32> -> vector<8x32xf32>
    %c0_53 = arith.constant 0 : index
    %c0_54 = arith.constant 0 : index
    %c0_55 = arith.constant 0 : index
    %102 = vector.load %arg10[%c0_53, %c0_54, %c0_55] : memref<1x1x32xf32, #tpu.memory_space<vmem>>, vector<1x1x32xf32>
    %103 = vector.shape_cast %102 : vector<1x1x32xf32> to vector<1x32xf32>
    %104 = vector.broadcast %103 : vector<1x32xf32> to vector<8x32xf32>
    %105 = arith.addf %101, %104 : vector<8x32xf32>
    %106 = vector.shape_cast %105 : vector<8x32xf32> to vector<1x8x32xf32>
    %107 = arith.addf %86, %106 : vector<1x8x32xf32>
    %c0_56 = arith.constant 0 : index
    %c0_57 = arith.constant 0 : index
    %c0_58 = arith.constant 0 : index
    %108 = vector.load %arg11[%c0_56, %c0_57, %c0_58] : memref<1x1x32xf32, #tpu.memory_space<vmem>>, vector<1x1x32xf32>
    %109 = vector.shape_cast %108 : vector<1x1x32xf32> to vector<1x32xf32>
    %c0_59 = arith.constant 0 : index
    %c0_60 = arith.constant 0 : index
    %c0_61 = arith.constant 0 : index
    %110 = vector.load %arg12[%c0_59, %c0_60, %c0_61] : memref<1x1x32xf32, #tpu.memory_space<vmem>>, vector<1x1x32xf32>
    %111 = vector.shape_cast %110 : vector<1x1x32xf32> to vector<1x32xf32>
    %cst_62 = arith.constant dense<0.000000e+00> : vector<1x8xf32>
    %112 = vector.multi_reduction <add>, %107, %cst_62 [2] : vector<1x8x32xf32> to vector<1x8xf32>
    %113 = vector.shape_cast %112 : vector<1x8xf32> to vector<1x8x1xf32>
    %cst_63 = arith.constant 3.200000e+01 : f32
    %114 = vector.broadcast %cst_63 : f32 to vector<1x8x1xf32>
    %115 = arith.divf %113, %114 : vector<1x8x1xf32>
    %116 = vector.broadcast %115 : vector<1x8x1xf32> to vector<1x8x32xf32>
    %117 = arith.subf %107, %116 : vector<1x8x32xf32>
    %118 = arith.mulf %117, %117 : vector<1x8x32xf32>
    %cst_64 = arith.constant dense<0.000000e+00> : vector<1x8xf32>
    %119 = vector.multi_reduction <add>, %118, %cst_64 [2] : vector<1x8x32xf32> to vector<1x8xf32>
    %120 = vector.shape_cast %119 : vector<1x8xf32> to vector<1x8x1xf32>
    %cst_65 = arith.constant 3.200000e+01 : f32
    %121 = vector.broadcast %cst_65 : f32 to vector<1x8x1xf32>
    %122 = arith.divf %120, %121 : vector<1x8x1xf32>
    %cst_66 = arith.constant 9.99999974E-6 : f32
    %123 = vector.broadcast %cst_66 : f32 to vector<1x8x1xf32>
    %124 = arith.addf %122, %123 : vector<1x8x1xf32>
    %125 = math.rsqrt %124 : vector<1x8x1xf32>
    %126 = vector.broadcast %125 : vector<1x8x1xf32> to vector<1x8x32xf32>
    %127 = arith.mulf %117, %126 : vector<1x8x32xf32>
    %128 = vector.shape_cast %109 : vector<1x32xf32> to vector<1x1x32xf32>
    %129 = vector.broadcast %128 : vector<1x1x32xf32> to vector<1x8x32xf32>
    %130 = arith.mulf %127, %129 : vector<1x8x32xf32>
    %131 = vector.shape_cast %111 : vector<1x32xf32> to vector<1x1x32xf32>
    %132 = vector.broadcast %131 : vector<1x1x32xf32> to vector<1x8x32xf32>
    %133 = arith.addf %130, %132 : vector<1x8x32xf32>
    %c0_67 = arith.constant 0 : index
    %c0_68 = arith.constant 0 : index
    %c0_69 = arith.constant 0 : index
    %134 = vector.load %arg18[%c0_67, %c0_68, %c0_69] : memref<1x8x32xf32, #tpu.memory_space<vmem>>, vector<1x8x32xf32>
    tpu.vector_store %arg18[%c0_67, %c0_68, %c0_69], %133 {strides = array<i32>} : memref<1x8x32xf32, #tpu.memory_space<vmem>>, vector<1x8x32xf32>,
    %c1_i32 = arith.constant 1 : i32
    %135 = arith.cmpi eq, %arg1, %c1_i32 : i32
    %136 = arith.extui %135 : i1 to i32
    %c0_i32_70 = arith.constant 0 : i32
    %137 = arith.cmpi ne, %136, %c0_i32_70 : i32
    scf.if %137 {
      %c0_71 = arith.constant 0 : index
      %c0_72 = arith.constant 0 : index
      %c0_73 = arith.constant 0 : index
      %138 = vector.load %arg17[%c0_71, %c0_72, %c0_73] : memref<1x8x32xf32, #tpu.memory_space<vmem>>, vector<1x8x32xf32>
      tpu.vector_store %arg17[%c0_71, %c0_72, %c0_73], %133 {strides = array<i32>} : memref<1x8x32xf32, #tpu.memory_space<vmem>>, vector<1x8x32xf32>,
      %139 = arith.truncf %133 : vector<1x8x32xf32> to vector<1x8x32xbf16>
      %140 = vector.shape_cast %139 : vector<1x8x32xbf16> to vector<8x32xbf16>
      %c0_74 = arith.constant 0 : index
      %c0_75 = arith.constant 0 : index
      %141 = vector.load %arg13[%c0_74, %c0_75] : memref<32x128xbf16, #tpu.memory_space<vmem>>, vector<32x128xbf16>
      %cst_76 = arith.constant dense<0.000000e+00> : vector<8x128xf32>
      %142 = tpu.matmul %140, %141, %cst_76 {dimension_numbers = #tpu.dot_dimension_numbers<[1], [0], [0], [1], [0, 0, 1, 1], [], []>} : vector<8x32xbf16>, vector<32x128xbf16>, vector<8x128xf32> -> vector<8x128xf32>
      %c0_77 = arith.constant 0 : index
      %c0_78 = arith.constant 0 : index
      %143 = vector.load %arg14[%c0_77, %c0_78] : memref<1x128xf32, #tpu.memory_space<vmem>>, vector<1x128xf32>
      %144 = vector.broadcast %143 : vector<1x128xf32> to vector<8x128xf32>
      %145 = arith.addf %142, %144 : vector<8x128xf32>
      %146 = vector.shape_cast %145 : vector<8x128xf32> to vector<1x8x128xf32>
      %cst_79 = arith.constant dense<0xFF800000> : vector<1x8xf32>
      %147 = vector.multi_reduction <maximumf>, %146, %cst_79 [2] : vector<1x8x128xf32> to vector<1x8xf32>
      %148 = vector.shape_cast %147 : vector<1x8xf32> to vector<1x8x1xf32>
      %149 = vector.broadcast %148 : vector<1x8x1xf32> to vector<1x8x128xf32>
      %150 = arith.subf %146, %149 : vector<1x8x128xf32>
      %151 = math.exp %150 : vector<1x8x128xf32>
      %cst_80 = arith.constant dense<0.000000e+00> : vector<1x8xf32>
      %152 = vector.multi_reduction <add>, %151, %cst_80 [2] : vector<1x8x128xf32> to vector<1x8xf32>
      %153 = vector.shape_cast %152 : vector<1x8xf32> to vector<1x8x1xf32>
      %154 = tpu.reciprocal %153 : vector<1x8x1xf32> -> vector<1x8x1xf32>
      %155 = vector.broadcast %154 : vector<1x8x1xf32> to vector<1x8x128xf32>
      %156 = arith.mulf %151, %155 : vector<1x8x128xf32>
      %c0_81 = arith.constant 0 : index
      %c0_82 = arith.constant 0 : index
      %c0_83 = arith.constant 0 : index
      %157 = vector.load %arg16[%c0_81, %c0_82, %c0_83] : memref<1x8x128xf32, #tpu.memory_space<vmem>>, vector<1x8x128xf32>
      tpu.vector_store %arg16[%c0_81, %c0_82, %c0_83], %156 {strides = array<i32>} : memref<1x8x128xf32, #tpu.memory_space<vmem>>, vector<1x8x128xf32>,
    } else {
    }
    return
  }
  func.func @transform_0(%arg0: i32, %arg1: i32) -> (i32, i32, i32) {
    %c0_i32 = arith.constant 0 : i32
    %c0_i32_0 = arith.constant 0 : i32
    %c0_i32_1 = arith.constant 0 : i32
    return %arg0, %c0_i32, %c0_i32_0 : i32, i32, i32
  }
  func.func @transform_1(%arg0: i32, %arg1: i32) -> (i32, i32, i32, i32) {
    %c0_i32 = arith.constant 0 : i32
    %c0_i32_0 = arith.constant 0 : i32
    %c0_i32_1 = arith.constant 0 : i32
    %c0_i32_2 = arith.constant 0 : i32
    return %arg1, %c0_i32, %c0_i32_0, %c0_i32_1 : i32, i32, i32, i32
  }
  func.func @transform_2(%arg0: i32, %arg1: i32) -> (i32, i32, i32) {
    %c0_i32 = arith.constant 0 : i32
    %c0_i32_0 = arith.constant 0 : i32
    %c0_i32_1 = arith.constant 0 : i32
    return %arg1, %c0_i32, %c0_i32_0 : i32, i32, i32
  }
  func.func @transform_3(%arg0: i32, %arg1: i32) -> (i32, i32, i32) {
    %c0_i32 = arith.constant 0 : i32
    %c0_i32_0 = arith.constant 0 : i32
    %c0_i32_1 = arith.constant 0 : i32
    return %arg1, %c0_i32, %c0_i32_0 : i32, i32, i32
  }
  func.func @transform_4(%arg0: i32, %arg1: i32) -> (i32, i32, i32) {
    %c0_i32 = arith.constant 0 : i32
    %c0_i32_0 = arith.constant 0 : i32
    %c0_i32_1 = arith.constant 0 : i32
    return %arg1, %c0_i32, %c0_i32_0 : i32, i32, i32
  }
  func.func @transform_5(%arg0: i32, %arg1: i32) -> (i32, i32, i32) {
    %c0_i32 = arith.constant 0 : i32
    %c0_i32_0 = arith.constant 0 : i32
    %c0_i32_1 = arith.constant 0 : i32
    return %arg1, %c0_i32, %c0_i32_0 : i32, i32, i32
  }
  func.func @transform_6(%arg0: i32, %arg1: i32) -> (i32, i32, i32) {
    %c0_i32 = arith.constant 0 : i32
    %c0_i32_0 = arith.constant 0 : i32
    %c0_i32_1 = arith.constant 0 : i32
    return %arg1, %c0_i32, %c0_i32_0 : i32, i32, i32
  }
  func.func @transform_7(%arg0: i32, %arg1: i32) -> (i32, i32, i32) {
    %c0_i32 = arith.constant 0 : i32
    %c0_i32_0 = arith.constant 0 : i32
    %c0_i32_1 = arith.constant 0 : i32
    return %arg1, %c0_i32, %c0_i32_0 : i32, i32, i32
  }
  func.func @transform_8(%arg0: i32, %arg1: i32) -> (i32, i32, i32) {
    %c0_i32 = arith.constant 0 : i32
    %c0_i32_0 = arith.constant 0 : i32
    %c0_i32_1 = arith.constant 0 : i32
    return %arg1, %c0_i32, %c0_i32_0 : i32, i32, i32
  }
  func.func @transform_9(%arg0: i32, %arg1: i32) -> (i32, i32, i32) {
    %c0_i32 = arith.constant 0 : i32
    %c0_i32_0 = arith.constant 0 : i32
    %c0_i32_1 = arith.constant 0 : i32
    return %arg1, %c0_i32, %c0_i32_0 : i32, i32, i32
  }
  func.func @transform_10(%arg0: i32, %arg1: i32) -> (i32, i32, i32) {
    %c0_i32 = arith.constant 0 : i32
    %c0_i32_0 = arith.constant 0 : i32
    %c0_i32_1 = arith.constant 0 : i32
    return %arg1, %c0_i32, %c0_i32_0 : i32, i32, i32
  }
  func.func @transform_11(%arg0: i32, %arg1: i32) -> (i32, i32) {
    %c0_i32 = arith.constant 0 : i32
    %c0_i32_0 = arith.constant 0 : i32
    %c0_i32_1 = arith.constant 0 : i32
    return %c0_i32, %c0_i32_0 : i32, i32
  }
  func.func @transform_12(%arg0: i32, %arg1: i32) -> (i32, i32) {
    %c0_i32 = arith.constant 0 : i32
    %c0_i32_0 = arith.constant 0 : i32
    %c0_i32_1 = arith.constant 0 : i32
    return %c0_i32, %c0_i32_0 : i32, i32
  }
  func.func @transform_13(%arg0: i32, %arg1: i32) -> i32 {
    %c0_i32 = arith.constant 0 : i32
    %c0_i32_0 = arith.constant 0 : i32
    return %c0_i32 : i32
  }
  func.func @transform_14(%arg0: i32, %arg1: i32) -> (i32, i32, i32) {
    %c0_i32 = arith.constant 0 : i32
    %c0_i32_0 = arith.constant 0 : i32
    %c0_i32_1 = arith.constant 0 : i32
    return %arg0, %c0_i32, %c0_i32_0 : i32, i32, i32
  }
  func.func @transform_15(%arg0: i32, %arg1: i32) -> (i32, i32, i32) {
    %c0_i32 = arith.constant 0 : i32
    %c0_i32_0 = arith.constant 0 : i32
    %c0_i32_1 = arith.constant 0 : i32
    return %arg0, %c0_i32, %c0_i32_0 : i32, i32, i32
  }
}

</mosaic_0001>

<llo_original>
// kernel: tpu_custom_call.1
$region0: #{tpu_custom_call.1}
  #allocation0 [shape = 'u32[]', space=smem, size = 0x4, offset = 0x4, fixed_abs, tag = 'smem constant byte address 0x4 - core index']
  #allocation1 [shape = 'u32[144,128]{1,0:T(1,128)}', space=vmem, size = 0x12000, scoped, tag = 'internal scratch']
  #allocation2 [shape = 'f32[1,8,32]{2,1,0:T(8,128)}', space=vmem, size = 0x1000, scoped, tag = 'scratch operand']
  %s0 = inlined_call_operand.hbm [shape: f32[1,8,32], index: 0, kind: input, shape index: {}]
  %s1 = inlined_call_operand.vmem [shape: bf16[2,4,32,32], index: 1, kind: input, shape index: {}]
  %s2 = inlined_call_operand.vmem [shape: bf16[2,32,32], index: 2, kind: input, shape index: {}]
  %s3 = inlined_call_operand.vmem [shape: f32[2,1,32], index: 3, kind: input, shape index: {}]
  %s4 = inlined_call_operand.hbm [shape: f32[2,1,32], index: 4, kind: input, shape index: {}]
  %s5 = inlined_call_operand.hbm [shape: bf16[2,32,128], index: 5, kind: input, shape index: {}]
  %s6 = inlined_call_operand.vmem [shape: f32[2,1,128], index: 6, kind: input, shape index: {}]
  %s7 = inlined_call_operand.vmem [shape: bf16[2,128,32], index: 7, kind: input, shape index: {}]
  %s8 = inlined_call_operand.vmem [shape: f32[2,1,32], index: 8, kind: input, shape index: {}]
  %s9 = inlined_call_operand.vmem [shape: f32[2,1,32], index: 9, kind: input, shape index: {}]
  %s10 = inlined_call_operand.vmem [shape: f32[2,1,32], index: 10, kind: input, shape index: {}]
  %s11 = inlined_call_operand.vmem [shape: bf16[32,128], index: 11, kind: input, shape index: {}]
  %s12 = inlined_call_operand.vmem [shape: f32[1,128], index: 12, kind: input, shape index: {}]
  %s13 = inlined_call_operand.vmem [shape: f32[2], index: 13, kind: input, shape index: {}]
  %s14 = inlined_call_operand.hbm [shape: f32[1,8,128], index: 14, kind: output, shape index: {0}]
  %s15 = inlined_call_operand.hbm [shape: f32[1,8,32], index: 15, kind: output, shape index: {1}]
  %16 = xla_tuple %s14, %s15
  %s17 = sld [smem:[#allocation0]]
  $region121: #{tpu_custom_call.1} parent=0
    _
  %s19 = ssub.s32 1, %s17
  %s20 = scalar_select 0, %s19, %s17
  $region1: #{tpu_custom_call.1} parent=0
    #allocation3 [shape = 'u8[4096]{0}', space=vmem, size = 0x1000, scoped, tag = 'input window, operand 0, single buffered']
    #allocation4 [shape = 's32[2]{0}', space=sflag, size = 0x8, scoped, tag = 'scoped memory for tpu_custom_call.1']
    #allocation5 [shape = 's32[2]{0}', space=sflag, size = 0x8, scoped, tag = 'scoped memory for tpu_custom_call.1']
    #allocation6 [shape = 's32[2]{0}', space=sflag, size = 0x8, scoped, tag = 'scoped memory for tpu_custom_call.1']
    #allocation7 [shape = 'u8[1024]{0}', space=vmem, size = 0x400, scoped, tag = 'input window, operand 4']
    #allocation8 [shape = 's32[2]{0}', space=sflag, size = 0x8, scoped, tag = 'scoped memory for tpu_custom_call.1']
    #allocation9 [shape = 'u8[16384]{0}', space=vmem, size = 0x4000, scoped, tag = 'input window, operand 5']
    #allocation10 [shape = 'u8[512]{0}', space=smem, size = 0x200, scoped, tag = 'input window, operand 13, single buffered']
    #allocation11 [shape = 'u8[4096]{0}', space=vmem, size = 0x1000, scoped, tag = 'output window, operand 0, single buffered']
    #allocation12 [shape = 'u8[4096]{0}', space=vmem, size = 0x1000, scoped, tag = 'output window, operand 1, single buffered']
    #allocation13 [shape = 's32[1]{0}', space=sflag, size = 0x4, scoped, tag = 'scoped memory for tpu_custom_call.1']
    %21 = vsyncpa [#allocation4], 0
    %22 = vsyncpa [#allocation8], 0
    %s23 = scalar_lea.sflag [#allocation8], 1
    %24 = vsyncpa %s23, 0
    %25 = vsyncpa [#allocation6], 0
    %26 = vsyncpa [#allocation5], 0
    %27 = vsyncpa [#allocation13], 0
    loop: start=0, step=1, limit=4
    $region2: #{tpu_custom_call.1} parent=1 // loop_pre_header
      _
    $region3: #{tpu_custom_call.1} parent=1 // loop_header
      %s29 = sphi 0, %s33
      %p30 = scmp.ge.s32.totalorder %s29, 4
      %s36 = sphi 0, %s48
      %s37 = sphi 0, %s44
      %s38 = sphi 0, %s36
      %s39 = sphi 0, %s37
      %s40 = sphi 0, %s38
      %s41 = sphi 0, %s39
      %s51 = sphi 0, %s53
      %s54 = sphi 0, %s51
      %s55 = sphi 0, %s54
      %s71 = sphi 0, %s55
      %s77 = sphi 0, %s79
      %s80 = sphi 0, %s77
      %s81 = sphi 0, %s80
      %s97 = sphi 0, %s81
      %s103 = sphi 0, %s105
      %s106 = sphi 0, %s103
      %s107 = sphi 0, %s106
      %s123 = sphi 0, %s107
      %s129 = sphi 0, %s131
      %s132 = sphi 0, %s129
      %s133 = sphi 0, %s132
      %s149 = sphi 0, %s133
      %s155 = sphi 0, %s157
      %s158 = sphi 0, %s155
      %s159 = sphi 0, %s158
      %s175 = sphi 0, %s159
      %s181 = sphi 0, %s183
      %s184 = sphi 0, %s181
      %s185 = sphi 0, %s184
      %s201 = sphi 0, %s185
      %s207 = sphi 0, %s209
      %s210 = sphi 0, %s207
      %s211 = sphi 0, %s210
      %s227 = sphi 0, %s211
      %s233 = sphi 0, %s235
      %s236 = sphi 0, %s233
      %s237 = sphi 0, %s236
      %s253 = sphi 0, %s237
      %s259 = sphi 0, %s261
      %s262 = sphi 0, %s259
      %s263 = sphi 0, %s262
      %s279 = sphi 0, %s263
      %s285 = sphi 0, %s287
      %s288 = sphi 0, %s285
      %s289 = sphi 0, %s288
      %s305 = sphi 0, %s289
      %s311 = sphi 0, %s313
      %s314 = sphi 0, %s311
      %s315 = sphi 0, %s314
      %s331 = sphi 0, %s315
      %s335 = sphi 0, %s335
      %s337 = sphi 0, %s335
      %s338 = sphi 0, %s337
      %s352 = sphi 0, %s338
      %s356 = sphi 0, %s356
      %s358 = sphi 0, %s356
      %s359 = sphi 0, %s358
      %s373 = sphi 0, %s359
      %s377 = sphi 0, %s377
      %s379 = sphi 0, %s377
      %s380 = sphi 0, %s379
      %s394 = sphi 0, %s380
      %s400 = sphi 0, %s402
      %s403 = sphi 0, %s400
      %s404 = sphi 0, %s403
      %s420 = sphi 0, %s404
      %s426 = sphi 0, %s428
      %s429 = sphi 0, %s426
      %s430 = sphi 0, %s429
      %s446 = sphi 0, %s430
    $region4: #{tpu_custom_call.1} parent=1 // loop_header_branch
      %32 = sbr.rel (%p30) target = $region8
    $region5: #{tpu_custom_call.1} parent=1 // loop_body
      %s34 = ssub.s32 %s29, 1
      %s35 = ssub.s32 %s29, 2
      %s42 = sadd.s32 1, %s37
      %p43 = scmp.ge.s32.totalorder %s42, 2
      %s44 = scalar_select %p43, 0, %s42
      %s45 = sadd.s32 1, %s36
      %s46 = scalar_select %p43, %s45, %s36
      %p47 = scmp.ge.s32.totalorder %s46, 1
      %s48 = scalar_select %p47, 0, %s46
      %s49 = ssub.s32 %s36, %s48
      %p50 = scmp.eq.s32.totalorder %s49, 0
      %s52 = sadd.s32 %s51, 1
      %s53 = scalar_select %p50, %s51, %s52
      %p56 = pneg %p50
      %p57 = scmp.eq.s32.totalorder %s29, 1
      %p58 = por %p56, %p57
      %p59 = scmp.ne.s32.totalorder %s51, %s54
      %p60 = scmp.eq.s32.totalorder %s29, 0
      %p61 = por %p59, %p60
      %p62 = scmp.ne.s32.totalorder %s51, %s54
      %p63 = scmp.eq.s32.totalorder %s34, 1
      %p64 = por %p62, %p63
      %p65 = scmp.ne.s32.totalorder %s54, %s55
      %p66 = scmp.eq.s32.totalorder %s34, 0
      %p67 = por %p65, %p66
      %p68 = scmp.ne.s32.totalorder %s54, %s55
      %p69 = scmp.eq.s32.totalorder %s35, 1
      %p70 = por %p68, %p69
      %p72 = scmp.ne.s32.totalorder %s55, %s71
      %p73 = scmp.eq.s32.totalorder %s35, 0
      %p74 = por %p72, %p73
      %s75 = ssub.s32 %s37, %s44
      %p76 = scmp.eq.s32.totalorder %s75, 0
      %s78 = sadd.s32 %s77, 1
      %s79 = scalar_select %p76, %s77, %s78
      %p82 = pneg %p76
      %p83 = scmp.eq.s32.totalorder %s29, 1
      %p84 = por %p82, %p83
      %p85 = scmp.ne.s32.totalorder %s77, %s80
      %p86 = scmp.eq.s32.totalorder %s29, 0
      %p87 = por %p85, %p86
      %p88 = scmp.ne.s32.totalorder %s77, %s80
      %p89 = scmp.eq.s32.totalorder %s34, 1
      %p90 = por %p88, %p89
      %p91 = scmp.ne.s32.totalorder %s80, %s81
      %p92 = scmp.eq.s32.totalorder %s34, 0
      %p93 = por %p91, %p92
      %p94 = scmp.ne.s32.totalorder %s80, %s81
      %p95 = scmp.eq.s32.totalorder %s35, 1
      %p96 = por %p94, %p95
      %p98 = scmp.ne.s32.totalorder %s81, %s97
      %p99 = scmp.eq.s32.totalorder %s35, 0
      %p100 = por %p98, %p99
      %s101 = ssub.s32 %s37, %s44
      %p102 = scmp.eq.s32.totalorder %s101, 0
      %s104 = sadd.s32 %s103, 1
      %s105 = scalar_select %p102, %s103, %s104
      %p108 = pneg %p102
      %p109 = scmp.eq.s32.totalorder %s29, 1
      %p110 = por %p108, %p109
      %p111 = scmp.ne.s32.totalorder %s103, %s106
      %p112 = scmp.eq.s32.totalorder %s29, 0
      %p113 = por %p111, %p112
      %p114 = scmp.ne.s32.totalorder %s103, %s106
      %p115 = scmp.eq.s32.totalorder %s34, 1
      %p116 = por %p114, %p115
      %p117 = scmp.ne.s32.totalorder %s106, %s107
      %p118 = scmp.eq.s32.totalorder %s34, 0
      %p119 = por %p117, %p118
      %p120 = scmp.ne.s32.totalorder %s106, %s107
      %p121 = scmp.eq.s32.totalorder %s35, 1
      %p122 = por %p120, %p121
      %p124 = scmp.ne.s32.totalorder %s107, %s123
      %p125 = scmp.eq.s32.totalorder %s35, 0
      %p126 = por %p124, %p125
      %s127 = ssub.s32 %s37, %s44
      %p128 = scmp.eq.s32.totalorder %s127, 0
      %s130 = sadd.s32 %s129, 1
      %s131 = scalar_select %p128, %s129, %s130
      %p134 = pneg %p128
      %p135 = scmp.eq.s32.totalorder %s29, 1
      %p136 = por %p134, %p135
      %p137 = scmp.ne.s32.totalorder %s129, %s132
      %p138 = scmp.eq.s32.totalorder %s29, 0
      %p139 = por %p137, %p138
      %p140 = scmp.ne.s32.totalorder %s129, %s132
      %p141 = scmp.eq.s32.totalorder %s34, 1
      %p142 = por %p140, %p141
      %p143 = scmp.ne.s32.totalorder %s132, %s133
      %p144 = scmp.eq.s32.totalorder %s34, 0
      %p145 = por %p143, %p144
      %p146 = scmp.ne.s32.totalorder %s132, %s133
      %p147 = scmp.eq.s32.totalorder %s35, 1
      %p148 = por %p146, %p147
      %p150 = scmp.ne.s32.totalorder %s133, %s149
      %p151 = scmp.eq.s32.totalorder %s35, 0
      %p152 = por %p150, %p151
      %s153 = ssub.s32 %s37, %s44
      %p154 = scmp.eq.s32.totalorder %s153, 0
      %s156 = sadd.s32 %s155, 1
      %s157 = scalar_select %p154, %s155, %s156
      %p160 = pneg %p154
      %p161 = scmp.eq.s32.totalorder %s29, 1
      %p162 = por %p160, %p161
      %p163 = scmp.ne.s32.totalorder %s155, %s158
      %p164 = scmp.eq.s32.totalorder %s29, 0
      %p165 = por %p163, %p164
      %p166 = scmp.ne.s32.totalorder %s155, %s158
      %p167 = scmp.eq.s32.totalorder %s34, 1
      %p168 = por %p166, %p167
      %p169 = scmp.ne.s32.totalorder %s158, %s159
      %p170 = scmp.eq.s32.totalorder %s34, 0
      %p171 = por %p169, %p170
      %p172 = scmp.ne.s32.totalorder %s158, %s159
      %p173 = scmp.eq.s32.totalorder %s35, 1
      %p174 = por %p172, %p173
      %p176 = scmp.ne.s32.totalorder %s159, %s175
      %p177 = scmp.eq.s32.totalorder %s35, 0
      %p178 = por %p176, %p177
      %s179 = ssub.s32 %s37, %s44
      %p180 = scmp.eq.s32.totalorder %s179, 0
      %s182 = sadd.s32 %s181, 1
      %s183 = scalar_select %p180, %s181, %s182
      %p186 = pneg %p180
      %p187 = scmp.eq.s32.totalorder %s29, 1
      %p188 = por %p186, %p187
      %p189 = scmp.ne.s32.totalorder %s181, %s184
      %p190 = scmp.eq.s32.totalorder %s29, 0
      %p191 = por %p189, %p190
      %p192 = scmp.ne.s32.totalorder %s181, %s184
      %p193 = scmp.eq.s32.totalorder %s34, 1
      %p194 = por %p192, %p193
      %p195 = scmp.ne.s32.totalorder %s184, %s185
      %p196 = scmp.eq.s32.totalorder %s34, 0
      %p197 = por %p195, %p196
      %p198 = scmp.ne.s32.totalorder %s184, %s185
      %p199 = scmp.eq.s32.totalorder %s35, 1
      %p200 = por %p198, %p199
      %p202 = scmp.ne.s32.totalorder %s185, %s201
      %p203 = scmp.eq.s32.totalorder %s35, 0
      %p204 = por %p202, %p203
      %s205 = ssub.s32 %s37, %s44
      %p206 = scmp.eq.s32.totalorder %s205, 0
      %s208 = sadd.s32 %s207, 1
      %s209 = scalar_select %p206, %s207, %s208
      %p212 = pneg %p206
      %p213 = scmp.eq.s32.totalorder %s29, 1
      %p214 = por %p212, %p213
      %p215 = scmp.ne.s32.totalorder %s207, %s210
      %p216 = scmp.eq.s32.totalorder %s29, 0
      %p217 = por %p215, %p216
      %p218 = scmp.ne.s32.totalorder %s207, %s210
      %p219 = scmp.eq.s32.totalorder %s34, 1
      %p220 = por %p218, %p219
      %p221 = scmp.ne.s32.totalorder %s210, %s211
      %p222 = scmp.eq.s32.totalorder %s34, 0
      %p223 = por %p221, %p222
      %p224 = scmp.ne.s32.totalorder %s210, %s211
      %p225 = scmp.eq.s32.totalorder %s35, 1
      %p226 = por %p224, %p225
      %p228 = scmp.ne.s32.totalorder %s211, %s227
      %p229 = scmp.eq.s32.totalorder %s35, 0
      %p230 = por %p228, %p229
      %s231 = ssub.s32 %s37, %s44
      %p232 = scmp.eq.s32.totalorder %s231, 0
      %s234 = sadd.s32 %s233, 1
      %s235 = scalar_select %p232, %s233, %s234
      %p238 = pneg %p232
      %p239 = scmp.eq.s32.totalorder %s29, 1
      %p240 = por %p238, %p239
      %p241 = scmp.ne.s32.totalorder %s233, %s236
      %p242 = scmp.eq.s32.totalorder %s29, 0
      %p243 = por %p241, %p242
      %p244 = scmp.ne.s32.totalorder %s233, %s236
      %p245 = scmp.eq.s32.totalorder %s34, 1
      %p246 = por %p244, %p245
      %p247 = scmp.ne.s32.totalorder %s236, %s237
      %p248 = scmp.eq.s32.totalorder %s34, 0
      %p249 = por %p247, %p248
      %p250 = scmp.ne.s32.totalorder %s236, %s237
      %p251 = scmp.eq.s32.totalorder %s35, 1
      %p252 = por %p250, %p251
      %p254 = scmp.ne.s32.totalorder %s237, %s253
      %p255 = scmp.eq.s32.totalorder %s35, 0
      %p256 = por %p254, %p255
      %s257 = ssub.s32 %s37, %s44
      %p258 = scmp.eq.s32.totalorder %s257, 0
      %s260 = sadd.s32 %s259, 1
      %s261 = scalar_select %p258, %s259, %s260
      %p264 = pneg %p258
      %p265 = scmp.eq.s32.totalorder %s29, 1
      %p266 = por %p264, %p265
      %p267 = scmp.ne.s32.totalorder %s259, %s262
      %p268 = scmp.eq.s32.totalorder %s29, 0
      %p269 = por %p267, %p268
      %p270 = scmp.ne.s32.totalorder %s259, %s262
      %p271 = scmp.eq.s32.totalorder %s34, 1
      %p272 = por %p270, %p271
      %p273 = scmp.ne.s32.totalorder %s262, %s263
      %p274 = scmp.eq.s32.totalorder %s34, 0
      %p275 = por %p273, %p274
      %p276 = scmp.ne.s32.totalorder %s262, %s263
      %p277 = scmp.eq.s32.totalorder %s35, 1
      %p278 = por %p276, %p277
      %p280 = scmp.ne.s32.totalorder %s263, %s279
      %p281 = scmp.eq.s32.totalorder %s35, 0
      %p282 = por %p280, %p281
      %s283 = ssub.s32 %s37, %s44
      %p284 = scmp.eq.s32.totalorder %s283, 0
      %s286 = sadd.s32 %s285, 1
      %s287 = scalar_select %p284, %s285, %s286
      %p290 = pneg %p284
      %p291 = scmp.eq.s32.totalorder %s29, 1
      %p292 = por %p290, %p291
      %p293 = scmp.ne.s32.totalorder %s285, %s288
      %p294 = scmp.eq.s32.totalorder %s29, 0
      %p295 = por %p293, %p294
      %p296 = scmp.ne.s32.totalorder %s285, %s288
      %p297 = scmp.eq.s32.totalorder %s34, 1
      %p298 = por %p296, %p297
      %p299 = scmp.ne.s32.totalorder %s288, %s289
      %p300 = scmp.eq.s32.totalorder %s34, 0
      %p301 = por %p299, %p300
      %p302 = scmp.ne.s32.totalorder %s288, %s289
      %p303 = scmp.eq.s32.totalorder %s35, 1
      %p304 = por %p302, %p303
      %p306 = scmp.ne.s32.totalorder %s289, %s305
      %p307 = scmp.eq.s32.totalorder %s35, 0
      %p308 = por %p306, %p307
      %s309 = ssub.s32 %s37, %s44
      %p310 = scmp.eq.s32.totalorder %s309, 0
      %s312 = sadd.s32 %s311, 1
      %s313 = scalar_select %p310, %s311, %s312
      %p316 = pneg %p310
      %p317 = scmp.eq.s32.totalorder %s29, 1
      %p318 = por %p316, %p317
      %p319 = scmp.ne.s32.totalorder %s311, %s314
      %p320 = scmp.eq.s32.totalorder %s29, 0
      %p321 = por %p319, %p320
      %p322 = scmp.ne.s32.totalorder %s311, %s314
      %p323 = scmp.eq.s32.totalorder %s34, 1
      %p324 = por %p322, %p323
      %p325 = scmp.ne.s32.totalorder %s314, %s315
      %p326 = scmp.eq.s32.totalorder %s34, 0
      %p327 = por %p325, %p326
      %p328 = scmp.ne.s32.totalorder %s314, %s315
      %p329 = scmp.eq.s32.totalorder %s35, 1
      %p330 = por %p328, %p329
      %p332 = scmp.ne.s32.totalorder %s315, %s331
      %p333 = scmp.eq.s32.totalorder %s35, 0
      %p334 = por %p332, %p333
      %s336 = sadd.s32 %s335, 1
      %p339 = scmp.eq.s32.totalorder %s29, 1
      %p340 = scmp.ne.s32.totalorder %s335, %s337
      %p341 = scmp.eq.s32.totalorder %s29, 0
      %p342 = por %p340, %p341
      %p343 = scmp.ne.s32.totalorder %s335, %s337
      %p344 = scmp.eq.s32.totalorder %s34, 1
      %p345 = por %p343, %p344
      %p346 = scmp.ne.s32.totalorder %s337, %s338
      %p347 = scmp.eq.s32.totalorder %s34, 0
      %p348 = por %p346, %p347
      %p349 = scmp.ne.s32.totalorder %s337, %s338
      %p350 = scmp.eq.s32.totalorder %s35, 1
      %p351 = por %p349, %p350
      %p353 = scmp.ne.s32.totalorder %s338, %s352
      %p354 = scmp.eq.s32.totalorder %s35, 0
      %p355 = por %p353, %p354
      %s357 = sadd.s32 %s356, 1
      %p360 = scmp.eq.s32.totalorder %s29, 1
      %p361 = scmp.ne.s32.totalorder %s356, %s358
      %p362 = scmp.eq.s32.totalorder %s29, 0
      %p363 = por %p361, %p362
      %p364 = scmp.ne.s32.totalorder %s356, %s358
      %p365 = scmp.eq.s32.totalorder %s34, 1
      %p366 = por %p364, %p365
      %p367 = scmp.ne.s32.totalorder %s358, %s359
      %p368 = scmp.eq.s32.totalorder %s34, 0
      %p369 = por %p367, %p368
      %p370 = scmp.ne.s32.totalorder %s358, %s359
      %p371 = scmp.eq.s32.totalorder %s35, 1
      %p372 = por %p370, %p371
      %p374 = scmp.ne.s32.totalorder %s359, %s373
      %p375 = scmp.eq.s32.totalorder %s35, 0
      %p376 = por %p374, %p375
      %s378 = sadd.s32 %s377, 1
      %p381 = scmp.eq.s32.totalorder %s29, 1
      %p382 = scmp.ne.s32.totalorder %s377, %s379
      %p383 = scmp.eq.s32.totalorder %s29, 0
      %p384 = por %p382, %p383
      %p385 = scmp.ne.s32.totalorder %s377, %s379
      %p386 = scmp.eq.s32.totalorder %s34, 1
      %p387 = por %p385, %p386
      %p388 = scmp.ne.s32.totalorder %s379, %s380
      %p389 = scmp.eq.s32.totalorder %s34, 0
      %p390 = por %p388, %p389
      %p391 = scmp.ne.s32.totalorder %s379, %s380
      %p392 = scmp.eq.s32.totalorder %s35, 1
      %p393 = por %p391, %p392
      %p395 = scmp.ne.s32.totalorder %s380, %s394
      %p396 = scmp.eq.s32.totalorder %s35, 0
      %p397 = por %p395, %p396
      %s398 = ssub.s32 %s36, %s48
      %p399 = scmp.eq.s32.totalorder %s398, 0
      %s401 = sadd.s32 %s400, 1
      %s402 = scalar_select %p399, %s400, %s401
      %p405 = pneg %p399
      %p406 = scmp.eq.s32.totalorder %s29, 1
      %p407 = por %p405, %p406
      %p408 = scmp.ne.s32.totalorder %s400, %s403
      %p409 = scmp.eq.s32.totalorder %s29, 0
      %p410 = por %p408, %p409
      %p411 = scmp.ne.s32.totalorder %s400, %s403
      %p412 = scmp.eq.s32.totalorder %s34, 1
      %p413 = por %p411, %p412
      %p414 = scmp.ne.s32.totalorder %s403, %s404
      %p415 = scmp.eq.s32.totalorder %s34, 0
      %p416 = por %p414, %p415
      %p417 = scmp.ne.s32.totalorder %s403, %s404
      %p418 = scmp.eq.s32.totalorder %s35, 1
      %p419 = por %p417, %p418
      %p421 = scmp.ne.s32.totalorder %s404, %s420
      %p422 = scmp.eq.s32.totalorder %s35, 0
      %p423 = por %p421, %p422
      %s424 = ssub.s32 %s36, %s48
      %p425 = scmp.eq.s32.totalorder %s424, 0
      %s427 = sadd.s32 %s426, 1
      %s428 = scalar_select %p425, %s426, %s427
      %p431 = pneg %p425
      %p432 = scmp.eq.s32.totalorder %s29, 1
      %p433 = por %p431, %p432
      %p434 = scmp.ne.s32.totalorder %s426, %s429
      %p435 = scmp.eq.s32.totalorder %s29, 0
      %p436 = por %p434, %p435
      %p437 = scmp.ne.s32.totalorder %s426, %s429
      %p438 = scmp.eq.s32.totalorder %s34, 1
      %p439 = por %p437, %p438
      %p440 = scmp.ne.s32.totalorder %s429, %s430
      %p441 = scmp.eq.s32.totalorder %s34, 0
      %p442 = por %p440, %p441
      %p443 = scmp.ne.s32.totalorder %s429, %s430
      %p444 = scmp.eq.s32.totalorder %s35, 1
      %p445 = por %p443, %p444
      %p447 = scmp.ne.s32.totalorder %s430, %s446
      %p448 = scmp.eq.s32.totalorder %s35, 0
      %p449 = por %p447, %p448
      %p450 = scmp.le.s32.totalorder 1, %s29
      %p451 = scmp.lt.s32.totalorder %s29, 3
      %p452 = pnand %p450, %p451
      %p453 = pneg %p452
      // Predicated region
      $region9: #{tpu_custom_call.1} parent=5 // pred_check
        _
      $region10: #{tpu_custom_call.1} parent=5 // pred_check_branch
        %455 = sbr.rel (%p452) target = $region12
      $region11: #{tpu_custom_call.1} parent=5 // pred_region
        %s456 = ssub.s32 %s29, 1
        // Predicated region
        $region13: #{tpu_custom_call.1} parent=11 // pred_check
          %p457 = pneg %p67
        $region14: #{tpu_custom_call.1} parent=11 // pred_check_branch
          %459 = sbr.rel (%p457) target = $region16
        $region15: #{tpu_custom_call.1} parent=11 // pred_region
          %s461 = ssub.s32 128, 128
          %462 = vsyncadd [#allocation4], %s461
          %s463 = smul.addr %s38, 128
          %s464 = scalar_lea.hbm %s0, %s463
          %s466 = sshll.u32 [#allocation3], 4
          %s467 = int_to_ptr.vmem [resolvable:$true] %s466
          %469 = dma.hbm_to_vmem [thread:$0]  %s464, 128, %s467, [#allocation4]
        $region16: #{tpu_custom_call.1} parent=11 // pred_fallthru
          _
        // Predicated region
        $region17: #{tpu_custom_call.1} parent=11 // pred_check
          %p470 = pneg %p348
        $region18: #{tpu_custom_call.1} parent=11 // pred_check_branch
          %472 = sbr.rel (%p470) target = $region20
        $region19: #{tpu_custom_call.1} parent=11 // pred_region
          _
        $region20: #{tpu_custom_call.1} parent=11 // pred_fallthru
          _
        // Predicated region
        $region21: #{tpu_custom_call.1} parent=11 // pred_check
          %p473 = pneg %p369
        $region22: #{tpu_custom_call.1} parent=11 // pred_check_branch
          %475 = sbr.rel (%p473) target = $region24
        $region23: #{tpu_custom_call.1} parent=11 // pred_region
          _
        $region24: #{tpu_custom_call.1} parent=11 // pred_fallthru
          _
        // Predicated region
        $region25: #{tpu_custom_call.1} parent=11 // pred_check
          %p476 = pneg %p390
        $region26: #{tpu_custom_call.1} parent=11 // pred_check_branch
          %478 = sbr.rel (%p476) target = $region28
        $region27: #{tpu_custom_call.1} parent=11 // pred_region
          %s480 = ssub.s32 16, 16
          %481 = vsyncadd [#allocation6], %s480
          %s483 = sshll.u32 %s13, 4
          %s484 = int_to_ptr.vmem [resolvable:$true] %s483
          %486 = dma.vmem_to_smem %s484, 16, [#allocation10], [#allocation6]
        $region28: #{tpu_custom_call.1} parent=11 // pred_fallthru
          _
      $region12: #{tpu_custom_call.1} parent=5 // pred_fallthru
        _
      %p487 = scmp.lt.s32.totalorder %s29, 2
      // Predicated region
      $region29: #{tpu_custom_call.1} parent=5 // pred_check
        %p488 = pneg %p487
      $region30: #{tpu_custom_call.1} parent=5 // pred_check_branch
        %490 = sbr.rel (%p488) target = $region32
      $region31: #{tpu_custom_call.1} parent=5 // pred_region
        // Predicated region
        $region33: #{tpu_custom_call.1} parent=31 // pred_check
          %p491 = pneg %p87
        $region34: #{tpu_custom_call.1} parent=31 // pred_check_branch
          %493 = sbr.rel (%p491) target = $region36
        $region35: #{tpu_custom_call.1} parent=31 // pred_region
          %p494 = scmp.lt.s32.totalorder %s37, 1
          %s495 = scalar_select %p494, %s37, 1
          %s496 = smul.addr %s495, 16
          %s497 = smul.addr %s496, 4
          %s498 = scalar_lea.vmem %s1, %s497
        $region36: #{tpu_custom_call.1} parent=31 // pred_fallthru
          _
        // Predicated region
        $region37: #{tpu_custom_call.1} parent=31 // pred_check
          %p499 = pneg %p113
        $region38: #{tpu_custom_call.1} parent=31 // pred_check_branch
          %501 = sbr.rel (%p499) target = $region40
        $region39: #{tpu_custom_call.1} parent=31 // pred_region
          %p502 = scmp.lt.s32.totalorder %s37, 1
          %s503 = scalar_select %p502, %s37, 1
          %s504 = smul.addr %s503, 4
          %s505 = smul.addr %s504, 4
          %s506 = scalar_lea.vmem %s2, %s505
        $region40: #{tpu_custom_call.1} parent=31 // pred_fallthru
          _
        // Predicated region
        $region41: #{tpu_custom_call.1} parent=31 // pred_check
          %p507 = pneg %p139
        $region42: #{tpu_custom_call.1} parent=31 // pred_check_branch
          %509 = sbr.rel (%p507) target = $region44
        $region43: #{tpu_custom_call.1} parent=31 // pred_region
          %p510 = scmp.lt.s32.totalorder %s37, 1
          %s511 = scalar_select %p510, %s37, 1
          %s512 = scalar_lea.vmem %s3, %s511
        $region44: #{tpu_custom_call.1} parent=31 // pred_fallthru
          _
        // Predicated region
        $region45: #{tpu_custom_call.1} parent=31 // pred_check
          %p513 = pneg %p165
        $region46: #{tpu_custom_call.1} parent=31 // pred_check_branch
          %515 = sbr.rel (%p513) target = $region48
        $region47: #{tpu_custom_call.1} parent=31 // pred_region
          %s516 = sand.u32 %s29, 1
          %s517 = scalar_lea.sflag [#allocation8], %s516
          %s518 = sand.u32 %s155, 1
          %s519 = scalar_lea.vmem [#allocation7], %s518
          %s521 = ssub.s32 16, 16
          %522 = vsyncadd %s517, %s521
          %s523 = smul.addr %s37, 16
          %s524 = scalar_lea.hbm %s4, %s523
          %s526 = sshll.u32 %s519, 4
          %s527 = int_to_ptr.vmem [resolvable:$true] %s526
          %529 = dma.hbm_to_vmem [thread:$0]  %s524, 16, %s527, %s517
        $region48: #{tpu_custom_call.1} parent=31 // pred_fallthru
          _
        // Predicated region
        $region49: #{tpu_custom_call.1} parent=31 // pred_check
          %p530 = pneg %p191
        $region50: #{tpu_custom_call.1} parent=31 // pred_check_branch
          %532 = sbr.rel (%p530) target = $region52
        $region51: #{tpu_custom_call.1} parent=31 // pred_region
          %s533 = sand.u32 %s29, 1
          %s534 = scalar_lea.sflag [#allocation8], %s533
          %s535 = sand.u32 %s181, 1
          %s536 = smul.addr %s535, 16
          %s537 = scalar_lea.vmem [#allocation9], %s536
          %s539 = ssub.s32 256, 256
          %540 = vsyncadd %s534, %s539
          %s541 = smul.addr %s37, 4
          %s542 = smul.addr %s541, 64
          %s543 = scalar_lea.hbm %s5, %s542
          %s544 = sshll.u32 %s537, 4
          %s545 = int_to_ptr.vmem [resolvable:$true] %s544
          %550 = dma.hbm_to_vmem [thread:$0]  %s543, 256, %s545, %s534, 64, 64, 4
        $region52: #{tpu_custom_call.1} parent=31 // pred_fallthru
          _
        // Predicated region
        $region53: #{tpu_custom_call.1} parent=31 // pred_check
          %p551 = pneg %p217
        $region54: #{tpu_custom_call.1} parent=31 // pred_check_branch
          %553 = sbr.rel (%p551) target = $region56
        $region55: #{tpu_custom_call.1} parent=31 // pred_region
          %p554 = scmp.lt.s32.totalorder %s37, 1
          %s555 = scalar_select %p554, %s37, 1
          %s556 = scalar_lea.vmem %s6, %s555
        $region56: #{tpu_custom_call.1} parent=31 // pred_fallthru
          _
        // Predicated region
        $region57: #{tpu_custom_call.1} parent=31 // pred_check
          %p557 = pneg %p243
        $region58: #{tpu_custom_call.1} parent=31 // pred_check_branch
          %559 = sbr.rel (%p557) target = $region60
        $region59: #{tpu_custom_call.1} parent=31 // pred_region
          %p560 = scmp.lt.s32.totalorder %s37, 1
          %s561 = scalar_select %p560, %s37, 1
          %s562 = smul.addr %s561, 16
          %s563 = smul.addr %s562, 4
          %s564 = scalar_lea.vmem %s7, %s563
        $region60: #{tpu_custom_call.1} parent=31 // pred_fallthru
          _
        // Predicated region
        $region61: #{tpu_custom_call.1} parent=31 // pred_check
          %p565 = pneg %p269
        $region62: #{tpu_custom_call.1} parent=31 // pred_check_branch
          %567 = sbr.rel (%p565) target = $region64
        $region63: #{tpu_custom_call.1} parent=31 // pred_region
          %p568 = scmp.lt.s32.totalorder %s37, 1
          %s569 = scalar_select %p568, %s37, 1
          %s570 = scalar_lea.vmem %s8, %s569
        $region64: #{tpu_custom_call.1} parent=31 // pred_fallthru
          _
        // Predicated region
        $region65: #{tpu_custom_call.1} parent=31 // pred_check
          %p571 = pneg %p295
        $region66: #{tpu_custom_call.1} parent=31 // pred_check_branch
          %573 = sbr.rel (%p571) target = $region68
        $region67: #{tpu_custom_call.1} parent=31 // pred_region
          %p574 = scmp.lt.s32.totalorder %s37, 1
          %s575 = scalar_select %p574, %s37, 1
          %s576 = scalar_lea.vmem %s9, %s575
        $region68: #{tpu_custom_call.1} parent=31 // pred_fallthru
          _
        // Predicated region
        $region69: #{tpu_custom_call.1} parent=31 // pred_check
          %p577 = pneg %p321
        $region70: #{tpu_custom_call.1} parent=31 // pred_check_branch
          %579 = sbr.rel (%p577) target = $region72
        $region71: #{tpu_custom_call.1} parent=31 // pred_region
          %p580 = scmp.lt.s32.totalorder %s37, 1
          %s581 = scalar_select %p580, %s37, 1
          %s582 = scalar_lea.vmem %s10, %s581
        $region72: #{tpu_custom_call.1} parent=31 // pred_fallthru
          _
      $region32: #{tpu_custom_call.1} parent=5 // pred_fallthru
        _
      %p583 = scmp.le.s32.totalorder 1, %s29
      %p584 = scmp.lt.s32.totalorder %s29, 3
      %p585 = pnand %p583, %p584
      %p586 = pneg %p585
      // Predicated region
      $region73: #{tpu_custom_call.1} parent=5 // pred_check
        _
      $region74: #{tpu_custom_call.1} parent=5 // pred_check_branch
        %588 = sbr.rel (%p585) target = $region76
      $region75: #{tpu_custom_call.1} parent=5 // pred_region
        %s589 = ssub.s32 %s29, 1
        // Predicated region
        $region77: #{tpu_custom_call.1} parent=75 // pred_check
          %p590 = pneg %p67
        $region78: #{tpu_custom_call.1} parent=75 // pred_check_branch
          %592 = sbr.rel (%p590) target = $region80
        $region79: #{tpu_custom_call.1} parent=75 // pred_region
          %593 = dma.done [#allocation4], 128
        $region80: #{tpu_custom_call.1} parent=75 // pred_fallthru
          _
        %s594 = sand.u32 %s34, 1
        %s595 = scalar_lea.sflag [#allocation8], %s594
        %s596 = sand.u32 %s158, 1
        %s597 = scalar_lea.vmem [#allocation7], %s596
        // Predicated region
        $region81: #{tpu_custom_call.1} parent=75 // pred_check
          %p598 = pneg %p171
        $region82: #{tpu_custom_call.1} parent=75 // pred_check_branch
          %600 = sbr.rel (%p598) target = $region84
        $region83: #{tpu_custom_call.1} parent=75 // pred_region
          %601 = dma.done %s595, 16
        $region84: #{tpu_custom_call.1} parent=75 // pred_fallthru
          _
        %s602 = sand.u32 %s34, 1
        %s603 = scalar_lea.sflag [#allocation8], %s602
        %s604 = sand.u32 %s184, 1
        %s605 = smul.addr %s604, 16
        %s606 = scalar_lea.vmem [#allocation9], %s605
        // Predicated region
        $region85: #{tpu_custom_call.1} parent=75 // pred_check
          %p607 = pneg %p197
        $region86: #{tpu_custom_call.1} parent=75 // pred_check_branch
          %609 = sbr.rel (%p607) target = $region88
        $region87: #{tpu_custom_call.1} parent=75 // pred_region
          %610 = dma.done %s603, 256
        $region88: #{tpu_custom_call.1} parent=75 // pred_fallthru
          _
        // Predicated region
        $region89: #{tpu_custom_call.1} parent=75 // pred_check
          %p611 = pneg %p390
        $region90: #{tpu_custom_call.1} parent=75 // pred_check_branch
          %613 = sbr.rel (%p611) target = $region92
        $region91: #{tpu_custom_call.1} parent=75 // pred_region
          %614 = dma.done [#allocation6], 16
        $region92: #{tpu_custom_call.1} parent=75 // pred_fallthru
          _
        %615 = sfence
        %p616 = pneg %p67
        %p617 = pneg %p64
        %p618 = scmp.lt.s32.totalorder %s39, 1
        %s619 = scalar_select %p618, %s39, 1
        %s620 = smul.addr %s619, 16
        %s621 = smul.addr %s620, 4
        %s622 = scalar_lea.vmem %s1, %s621
        %p623 = pneg %p93
        %p624 = pneg %p90
        %p625 = scmp.lt.s32.totalorder %s39, 1
        %s626 = scalar_select %p625, %s39, 1
        %s627 = smul.addr %s626, 4
        %s628 = smul.addr %s627, 4
        %s629 = scalar_lea.vmem %s2, %s628
        %p630 = pneg %p119
        %p631 = pneg %p116
        %p632 = scmp.lt.s32.totalorder %s39, 1
        %s633 = scalar_select %p632, %s39, 1
        %s634 = scalar_lea.vmem %s3, %s633
        %p635 = pneg %p145
        %p636 = pneg %p142
        %s637 = sand.u32 %s34, 1
        %s638 = scalar_lea.sflag [#allocation8], %s637
        %s639 = sand.u32 %s158, 1
        %s640 = scalar_lea.vmem [#allocation7], %s639
        %p641 = pneg %p171
        %p642 = pneg %p168
        %s643 = sand.u32 %s34, 1
        %s644 = scalar_lea.sflag [#allocation8], %s643
        %s645 = sand.u32 %s184, 1
        %s646 = smul.addr %s645, 16
        %s647 = scalar_lea.vmem [#allocation9], %s646
        %p648 = pneg %p197
        %p649 = pneg %p194
        %p650 = scmp.lt.s32.totalorder %s39, 1
        %s651 = scalar_select %p650, %s39, 1
        %s652 = scalar_lea.vmem %s6, %s651
        %p653 = pneg %p223
        %p654 = pneg %p220
        %p655 = scmp.lt.s32.totalorder %s39, 1
        %s656 = scalar_select %p655, %s39, 1
        %s657 = smul.addr %s656, 16
        %s658 = smul.addr %s657, 4
        %s659 = scalar_lea.vmem %s7, %s658
        %p660 = pneg %p249
        %p661 = pneg %p246
        %p662 = scmp.lt.s32.totalorder %s39, 1
        %s663 = scalar_select %p662, %s39, 1
        %s664 = scalar_lea.vmem %s8, %s663
        %p665 = pneg %p275
        %p666 = pneg %p272
        %p667 = scmp.lt.s32.totalorder %s39, 1
        %s668 = scalar_select %p667, %s39, 1
        %s669 = scalar_lea.vmem %s9, %s668
        %p670 = pneg %p301
        %p671 = pneg %p298
        %p672 = scmp.lt.s32.totalorder %s39, 1
        %s673 = scalar_select %p672, %s39, 1
        %s674 = scalar_lea.vmem %s10, %s673
        %p675 = pneg %p327
        %p676 = pneg %p324
        %p677 = pneg %p348
        %p678 = pneg %p345
        %p679 = pneg %p369
        %p680 = pneg %p366
        %p681 = pneg %p390
        %p682 = pneg %p387
        %p683 = pneg %p416
        %p684 = pneg %p413
        %p685 = pneg %p442
        %p686 = pneg %p439
        %p687 = scmp.lt.s32.totalorder %s39, 1
        %s688 = scalar_select %p687, %s39, 1
        %s689 = smul.addr %s688, 16
        %s690 = smul.addr %s689, 4
        %s691 = scalar_lea.vmem %s1, %s690
        %p692 = scmp.lt.s32.totalorder %s39, 1
        %s693 = scalar_select %p692, %s39, 1
        %s694 = smul.addr %s693, 4
        %s695 = smul.addr %s694, 4
        %s696 = scalar_lea.vmem %s2, %s695
        %p697 = scmp.lt.s32.totalorder %s39, 1
        %s698 = scalar_select %p697, %s39, 1
        %s699 = scalar_lea.vmem %s3, %s698
        %p700 = scmp.lt.s32.totalorder %s39, 1
        %s701 = scalar_select %p700, %s39, 1
        %s702 = scalar_lea.vmem %s6, %s701
        %p703 = scmp.lt.s32.totalorder %s39, 1
        %s704 = scalar_select %p703, %s39, 1
        %s705 = smul.addr %s704, 16
        %s706 = smul.addr %s705, 4
        %s707 = scalar_lea.vmem %s7, %s706
        %p708 = scmp.lt.s32.totalorder %s39, 1
        %s709 = scalar_select %p708, %s39, 1
        %s710 = scalar_lea.vmem %s8, %s709
        %p711 = scmp.lt.s32.totalorder %s39, 1
        %s712 = scalar_select %p711, %s39, 1
        %s713 = scalar_lea.vmem %s9, %s712
        %p714 = scmp.lt.s32.totalorder %s39, 1
        %s715 = scalar_select %p714, %s39, 1
        %s716 = scalar_lea.vmem %s10, %s715
        %p718 = scmp.eq.s32.totalorder %s39, 0
        // Predicated region
        $region93: #{tpu_custom_call.1} parent=75 // pred_check
          %p719 = pneg %p718
        $region94: #{tpu_custom_call.1} parent=75 // pred_check_branch
          %721 = sbr.rel (%p719) target = $region96
        $region95: #{tpu_custom_call.1} parent=75 // pred_region
          %v722 = vld [vmem:[#allocation3] sm:$0xff]
          %vm723 = vcmask 261120
          %724 = vst.msk [vmem:[#allocation2] sm:$0xff] %vm723, %v722
        $region96: #{tpu_custom_call.1} parent=75 // pred_fallthru
          _
        %v725 = vld [vmem:[#allocation2] sm:$0xff]
        %v726 = vpack.c.bf16 %v725, %v725
        %v727 = vld [vmem:[%s691] sm:$0xf]
        %v728 = vld [vmem:[%s691 + $0x4] sm:$0xf]
        %v729 = vld [vmem:[%s691 + $0x8] sm:$0xf]
        %v730 = vld [vmem:[%s691 + $0xc] sm:$0xf]
        %v735 = vunpack.c.l.b16 %v727
        %v736 = vunpack.c.l.b16 %v728
        %v737 = vunpack.c.l.b16 %v729
        %v738 = vunpack.c.l.b16 %v730
        %v739 = vpack.c.b16 %v736, %v735
        %v740 = vpack.c.b16 %v738, %v737
        %vm743 = vcmask 261120
        %v745 = vsel %vm743, %v726, 0
        %747 = vmatprep.subr.bf16.mxu0 0
        %748 = vmatpush1.bf16.msra.mxu0 %v739
        %749 = vmatprep.subr.bf16.mxu0 0
        %750 = vmatpush1.bf16.msra.mxu0 %v740
        %751 = vmatprep.subr.bf16.mxu0 0
        %752 = vmatpush1.bf16.msra.mxu0 0
        %753 = vmatprep.subr.bf16.mxu0 0
        %754 = vmatpush1.bf16.msra.mxu0 0
        %755 = vmatprep.subr.bf16.mxu0 0
        %756 = vmatpush1.bf16.msra.mxu0 0
        %757 = vmatprep.subr.bf16.mxu0 0
        %758 = vmatpush1.bf16.msra.mxu0 0
        %759 = vmatprep.subr.bf16.mxu0 0
        %760 = vmatpush1.bf16.msra.mxu0 0
        %761 = vmatprep.subr.bf16.mxu0 0
        %762 = vmatpush1.bf16.msra.mxu0 0
        %763 = vmatprep.subr.bf16.mxu0 0
        %764 = vmatpush1.bf16.msra.mxu0 0
        %765 = vmatprep.subr.bf16.mxu0 0
        %766 = vmatpush1.bf16.msra.mxu0 0
        %767 = vmatprep.subr.bf16.mxu0 0
        %768 = vmatpush1.bf16.msra.mxu0 0
        %769 = vmatprep.subr.bf16.mxu0 0
        %770 = vmatpush1.bf16.msra.mxu0 0
        %771 = vmatprep.subr.bf16.mxu0 0
        %772 = vmatpush1.bf16.msra.mxu0 0
        %773 = vmatprep.subr.bf16.mxu0 0
        %774 = vmatpush1.bf16.msra.mxu0 0
        %775 = vmatprep.subr.bf16.mxu0 0
        %776 = vmatpush1.bf16.msra.mxu0 0
        %777 = vmatprep.subr.bf16.mxu0 0
        %778 = vmatpush1.bf16.msra.mxu0 0
        %779 = vmatprep.mubr.bf16.mxu0 0
        %780 = vmatmul.mubr.bf16.gmra.mrb[0].mxu0 %v745
        %v781 = vpop.f32.mrb[0].mxu0
        %v782 = vadd.f32 0.0, %v781
        %v783 = vpop.f32.mrb[0].mxu0
        %v784 = vpop.f32.mrb[0].mxu0
        %v785 = vpop.f32.mrb[0].mxu0
        %786 = vdwg.mxu0
        %v787 = vpack.c.bf16 %v782, %v782
        %s788 = scalar_lea.vmem %s691, 16
        %v789 = vld [vmem:[%s788] sm:$0xf]
        %v790 = vld [vmem:[%s788 + $0x4] sm:$0xf]
        %v791 = vld [vmem:[%s788 + $0x8] sm:$0xf]
        %v792 = vld [vmem:[%s788 + $0xc] sm:$0xf]
        %v797 = vunpack.c.l.b16 %v789
        %v798 = vunpack.c.l.b16 %v790
        %v799 = vunpack.c.l.b16 %v791
        %v800 = vunpack.c.l.b16 %v792
        %v801 = vpack.c.b16 %v798, %v797
        %v802 = vpack.c.b16 %v800, %v799
        %805 = vmatprep.subr.bf16.mxu0 0
        %806 = vmatpush1.bf16.msra.mxu0 %v801
        %807 = vmatprep.subr.bf16.mxu0 0
        %808 = vmatpush1.bf16.msra.mxu0 %v802
        %809 = vmatprep.subr.bf16.mxu0 0
        %810 = vmatpush1.bf16.msra.mxu0 0
        %811 = vmatprep.subr.bf16.mxu0 0
        %812 = vmatpush1.bf16.msra.mxu0 0
        %813 = vmatprep.subr.bf16.mxu0 0
        %814 = vmatpush1.bf16.msra.mxu0 0
        %815 = vmatprep.subr.bf16.mxu0 0
        %816 = vmatpush1.bf16.msra.mxu0 0
        %817 = vmatprep.subr.bf16.mxu0 0
        %818 = vmatpush1.bf16.msra.mxu0 0
        %819 = vmatprep.subr.bf16.mxu0 0
        %820 = vmatpush1.bf16.msra.mxu0 0
        %821 = vmatprep.subr.bf16.mxu0 0
        %822 = vmatpush1.bf16.msra.mxu0 0
        %823 = vmatprep.subr.bf16.mxu0 0
        %824 = vmatpush1.bf16.msra.mxu0 0
        %825 = vmatprep.subr.bf16.mxu0 0
        %826 = vmatpush1.bf16.msra.mxu0 0
        %827 = vmatprep.subr.bf16.mxu0 0
        %828 = vmatpush1.bf16.msra.mxu0 0
        %829 = vmatprep.subr.bf16.mxu0 0
        %830 = vmatpush1.bf16.msra.mxu0 0
        %831 = vmatprep.subr.bf16.mxu0 0
        %832 = vmatpush1.bf16.msra.mxu0 0
        %833 = vmatprep.subr.bf16.mxu0 0
        %834 = vmatpush1.bf16.msra.mxu0 0
        %835 = vmatprep.subr.bf16.mxu0 0
        %836 = vmatpush1.bf16.msra.mxu0 0
        %837 = vmatprep.mubr.bf16.mxu0 0
        %838 = vmatmul.mubr.bf16.gmra.mrb[0].mxu0 %v745
        %v839 = vpop.f32.mrb[0].mxu0
        %v840 = vadd.f32 0.0, %v839
        %v841 = vpop.f32.mrb[0].mxu0
        %v842 = vpop.f32.mrb[0].mxu0
        %v843 = vpop.f32.mrb[0].mxu0
        %844 = vdwg.mxu0
        %v845 = vpack.c.bf16 %v840, %v840
        %s846 = scalar_lea.vmem %s691, 32
        %v847 = vld [vmem:[%s846] sm:$0xf]
        %v848 = vld [vmem:[%s846 + $0x4] sm:$0xf]
        %v849 = vld [vmem:[%s846 + $0x8] sm:$0xf]
        %v850 = vld [vmem:[%s846 + $0xc] sm:$0xf]
        %v855 = vunpack.c.l.b16 %v847
        %v856 = vunpack.c.l.b16 %v848
        %v857 = vunpack.c.l.b16 %v849
        %v858 = vunpack.c.l.b16 %v850
        %v859 = vpack.c.b16 %v856, %v855
        %v860 = vpack.c.b16 %v858, %v857
        %863 = vmatprep.subr.bf16.mxu0 0
        %864 = vmatpush1.bf16.msra.mxu0 %v859
        %865 = vmatprep.subr.bf16.mxu0 0
        %866 = vmatpush1.bf16.msra.mxu0 %v860
        %867 = vmatprep.subr.bf16.mxu0 0
        %868 = vmatpush1.bf16.msra.mxu0 0
        %869 = vmatprep.subr.bf16.mxu0 0
        %870 = vmatpush1.bf16.msra.mxu0 0
        %871 = vmatprep.subr.bf16.mxu0 0
        %872 = vmatpush1.bf16.msra.mxu0 0
        %873 = vmatprep.subr.bf16.mxu0 0
        %874 = vmatpush1.bf16.msra.mxu0 0
        %875 = vmatprep.subr.bf16.mxu0 0
        %876 = vmatpush1.bf16.msra.mxu0 0
        %877 = vmatprep.subr.bf16.mxu0 0
        %878 = vmatpush1.bf16.msra.mxu0 0
        %879 = vmatprep.subr.bf16.mxu0 0
        %880 = vmatpush1.bf16.msra.mxu0 0
        %881 = vmatprep.subr.bf16.mxu0 0
        %882 = vmatpush1.bf16.msra.mxu0 0
        %883 = vmatprep.subr.bf16.mxu0 0
        %884 = vmatpush1.bf16.msra.mxu0 0
        %885 = vmatprep.subr.bf16.mxu0 0
        %886 = vmatpush1.bf16.msra.mxu0 0
        %887 = vmatprep.subr.bf16.mxu0 0
        %888 = vmatpush1.bf16.msra.mxu0 0
        %889 = vmatprep.subr.bf16.mxu0 0
        %890 = vmatpush1.bf16.msra.mxu0 0
        %891 = vmatprep.subr.bf16.mxu0 0
        %892 = vmatpush1.bf16.msra.mxu0 0
        %893 = vmatprep.subr.bf16.mxu0 0
        %894 = vmatpush1.bf16.msra.mxu0 0
        %895 = vmatprep.mubr.bf16.mxu0 0
        %896 = vmatmul.mubr.bf16.gmra.mrb[0].mxu0 %v745
        %v897 = vpop.f32.mrb[0].mxu0
        %v898 = vadd.f32 0.0, %v897
        %v899 = vpop.f32.mrb[0].mxu0
        %v900 = vpop.f32.mrb[0].mxu0
        %v901 = vpop.f32.mrb[0].mxu0
        %902 = vdwg.mxu0
        %v903 = vpack.c.bf16 %v898, %v898
        %s904 = scalar_lea.vmem %s691, 48
        %v905 = vld [vmem:[%s904] sm:$0xf]
        %v906 = vld [vmem:[%s904 + $0x4] sm:$0xf]
        %v907 = vld [vmem:[%s904 + $0x8] sm:$0xf]
        %v908 = vld [vmem:[%s904 + $0xc] sm:$0xf]
        %v913 = vunpack.c.l.b16 %v905
        %v914 = vunpack.c.l.b16 %v906
        %v915 = vunpack.c.l.b16 %v907
        %v916 = vunpack.c.l.b16 %v908
        %v917 = vpack.c.b16 %v914, %v913
        %v918 = vpack.c.b16 %v916, %v915
        %921 = vmatprep.subr.bf16.mxu0 0
        %922 = vmatpush1.bf16.msra.mxu0 %v917
        %923 = vmatprep.subr.bf16.mxu0 0
        %924 = vmatpush1.bf16.msra.mxu0 %v918
        %925 = vmatprep.subr.bf16.mxu0 0
        %926 = vmatpush1.bf16.msra.mxu0 0
        %927 = vmatprep.subr.bf16.mxu0 0
        %928 = vmatpush1.bf16.msra.mxu0 0
        %929 = vmatprep.subr.bf16.mxu0 0
        %930 = vmatpush1.bf16.msra.mxu0 0
        %931 = vmatprep.subr.bf16.mxu0 0
        %932 = vmatpush1.bf16.msra.mxu0 0
        %933 = vmatprep.subr.bf16.mxu0 0
        %934 = vmatpush1.bf16.msra.mxu0 0
        %935 = vmatprep.subr.bf16.mxu0 0
        %936 = vmatpush1.bf16.msra.mxu0 0
        %937 = vmatprep.subr.bf16.mxu0 0
        %938 = vmatpush1.bf16.msra.mxu0 0
        %939 = vmatprep.subr.bf16.mxu0 0
        %940 = vmatpush1.bf16.msra.mxu0 0
        %941 = vmatprep.subr.bf16.mxu0 0
        %942 = vmatpush1.bf16.msra.mxu0 0
        %943 = vmatprep.subr.bf16.mxu0 0
        %944 = vmatpush1.bf16.msra.mxu0 0
        %945 = vmatprep.subr.bf16.mxu0 0
        %946 = vmatpush1.bf16.msra.mxu0 0
        %947 = vmatprep.subr.bf16.mxu0 0
        %948 = vmatpush1.bf16.msra.mxu0 0
        %949 = vmatprep.subr.bf16.mxu0 0
        %950 = vmatpush1.bf16.msra.mxu0 0
        %951 = vmatprep.subr.bf16.mxu0 0
        %952 = vmatpush1.bf16.msra.mxu0 0
        %953 = vmatprep.mubr.bf16.mxu0 0
        %954 = vmatmul.mubr.bf16.gmra.mrb[0].mxu0 %v745
        %v955 = vpop.f32.mrb[0].mxu0
        %v956 = vadd.f32 0.0, %v955
        %v957 = vpop.f32.mrb[0].mxu0
        %v958 = vpop.f32.mrb[0].mxu0
        %v959 = vpop.f32.mrb[0].mxu0
        %960 = vdwg.mxu0
        %v961 = vpack.c.bf16 %v956, %v956
        %v962 = vld [vmem:[%s696] sm:$0xf]
        %v963 = vld [vmem:[%s696 + $0x4] sm:$0xf]
        %v964 = vld [vmem:[%s696 + $0x8] sm:$0xf]
        %v965 = vld [vmem:[%s696 + $0xc] sm:$0xf]
        %v970 = vunpack.c.l.b16 %v962
        %v971 = vunpack.c.l.b16 %v963
        %v972 = vunpack.c.l.b16 %v964
        %v973 = vunpack.c.l.b16 %v965
        %v974 = vpack.c.b16 %v971, %v970
        %v975 = vpack.c.b16 %v973, %v972
        %978 = vmatprep.subr.bf16.mxu0 0
        %979 = vmatpush1.bf16.msra.mxu0 %v974
        %980 = vmatprep.subr.bf16.mxu0 0
        %981 = vmatpush1.bf16.msra.mxu0 %v975
        %982 = vmatprep.subr.bf16.mxu0 0
        %983 = vmatpush1.bf16.msra.mxu0 0
        %984 = vmatprep.subr.bf16.mxu0 0
        %985 = vmatpush1.bf16.msra.mxu0 0
        %986 = vmatprep.subr.bf16.mxu0 0
        %987 = vmatpush1.bf16.msra.mxu0 0
        %988 = vmatprep.subr.bf16.mxu0 0
        %989 = vmatpush1.bf16.msra.mxu0 0
        %990 = vmatprep.subr.bf16.mxu0 0
        %991 = vmatpush1.bf16.msra.mxu0 0
        %992 = vmatprep.subr.bf16.mxu0 0
        %993 = vmatpush1.bf16.msra.mxu0 0
        %994 = vmatprep.subr.bf16.mxu0 0
        %995 = vmatpush1.bf16.msra.mxu0 0
        %996 = vmatprep.subr.bf16.mxu0 0
        %997 = vmatpush1.bf16.msra.mxu0 0
        %998 = vmatprep.subr.bf16.mxu0 0
        %999 = vmatpush1.bf16.msra.mxu0 0
        %1000 = vmatprep.subr.bf16.mxu0 0
        %1001 = vmatpush1.bf16.msra.mxu0 0
        %1002 = vmatprep.subr.bf16.mxu0 0
        %1003 = vmatpush1.bf16.msra.mxu0 0
        %1004 = vmatprep.subr.bf16.mxu0 0
        %1005 = vmatpush1.bf16.msra.mxu0 0
        %1006 = vmatprep.subr.bf16.mxu0 0
        %1007 = vmatpush1.bf16.msra.mxu0 0
        %1008 = vmatprep.subr.bf16.mxu0 0
        %1009 = vmatpush1.bf16.msra.mxu0 0
        %1010 = vmatprep.mubr.bf16.mxu0 0
        %1011 = vmatmul.mubr.bf16.gmra.mrb[0].mxu0 %v745
        %v1012 = vpop.f32.mrb[0].mxu0
        %v1013 = vadd.f32 0.0, %v1012
        %v1014 = vpop.f32.mrb[0].mxu0
        %v1015 = vpop.f32.mrb[0].mxu0
        %v1016 = vpop.f32.mrb[0].mxu0
        %1017 = vdwg.mxu0
        %v1018 = vpack.c.bf16 %v1013, %v1013
        %v1020 = vsel %vm743, %v787, 0
        %v1023 = vsel %vm743, %v845, 0
        %1025 = vmatprep.subr.bf16.mxu0 0
        %1026 = vmatpush1.bf16.xpose.msra.mxu0 %v1023
        %1027 = vmatprep.subr.bf16.mxu0 0
        %1028 = vmatpush1.bf16.xpose.msra.mxu0 0
        %1029 = vmatprep.subr.bf16.mxu0 0
        %1030 = vmatpush1.bf16.xpose.msra.mxu0 0
        %1031 = vmatprep.subr.bf16.mxu0 0
        %1032 = vmatpush1.bf16.xpose.msra.mxu0 0
        %1033 = vmatprep.subr.bf16.mxu0 0
        %1034 = vmatpush1.bf16.xpose.msra.mxu0 0
        %1035 = vmatprep.subr.bf16.mxu0 0
        %1036 = vmatpush1.bf16.xpose.msra.mxu0 0
        %1037 = vmatprep.subr.bf16.mxu0 0
        %1038 = vmatpush1.bf16.xpose.msra.mxu0 0
        %1039 = vmatprep.subr.bf16.mxu0 0
        %1040 = vmatpush1.bf16.xpose.msra.mxu0 0
        %1041 = vmatprep.subr.bf16.mxu0 0
        %1042 = vmatpush1.bf16.xpose.msra.mxu0 0
        %1043 = vmatprep.subr.bf16.mxu0 0
        %1044 = vmatpush1.bf16.xpose.msra.mxu0 0
        %1045 = vmatprep.subr.bf16.mxu0 0
        %1046 = vmatpush1.bf16.xpose.msra.mxu0 0
        %1047 = vmatprep.subr.bf16.mxu0 0
        %1048 = vmatpush1.bf16.xpose.msra.mxu0 0
        %1049 = vmatprep.subr.bf16.mxu0 0
        %1050 = vmatpush1.bf16.xpose.msra.mxu0 0
        %1051 = vmatprep.subr.bf16.mxu0 0
        %1052 = vmatpush1.bf16.xpose.msra.mxu0 0
        %1053 = vmatprep.subr.bf16.mxu0 0
        %1054 = vmatpush1.bf16.xpose.msra.mxu0 0
        %1055 = vmatprep.subr.bf16.mxu0 0
        %1056 = vmatpush1.bf16.xpose.msra.mxu0 0
        %1057 = vmatprep.mubr.bf16.mxu0 0
        %1058 = vmatmul.mubr.bf16.gmra.mrb[0].mxu0 %v1020
        %v1059 = vpop.f32.mrb[0].mxu0
        %v1060 = vadd.f32 0.0, %v1059
        %v1061 = vpop.f32.mrb[0].mxu0
        %v1062 = vpop.f32.mrb[0].mxu0
        %v1063 = vpop.f32.mrb[0].mxu0
        %1064 = vdwg.mxu0
        %v1066 = vsel %vm743, %v903, 0
        %v1069 = vsel %vm743, %v961, 0
        %1071 = vmatprep.subr.bf16.mxu0 0
        %1072 = vmatpush1.bf16.xpose.msra.mxu0 %v1069
        %1073 = vmatprep.subr.bf16.mxu0 0
        %1074 = vmatpush1.bf16.xpose.msra.mxu0 0
        %1075 = vmatprep.subr.bf16.mxu0 0
        %1076 = vmatpush1.bf16.xpose.msra.mxu0 0
        %1077 = vmatprep.subr.bf16.mxu0 0
        %1078 = vmatpush1.bf16.xpose.msra.mxu0 0
        %1079 = vmatprep.subr.bf16.mxu0 0
        %1080 = vmatpush1.bf16.xpose.msra.mxu0 0
        %1081 = vmatprep.subr.bf16.mxu0 0
        %1082 = vmatpush1.bf16.xpose.msra.mxu0 0
        %1083 = vmatprep.subr.bf16.mxu0 0
        %1084 = vmatpush1.bf16.xpose.msra.mxu0 0
        %1085 = vmatprep.subr.bf16.mxu0 0
        %1086 = vmatpush1.bf16.xpose.msra.mxu0 0
        %1087 = vmatprep.subr.bf16.mxu0 0
        %1088 = vmatpush1.bf16.xpose.msra.mxu0 0
        %1089 = vmatprep.subr.bf16.mxu0 0
        %1090 = vmatpush1.bf16.xpose.msra.mxu0 0
        %1091 = vmatprep.subr.bf16.mxu0 0
        %1092 = vmatpush1.bf16.xpose.msra.mxu0 0
        %1093 = vmatprep.subr.bf16.mxu0 0
        %1094 = vmatpush1.bf16.xpose.msra.mxu0 0
        %1095 = vmatprep.subr.bf16.mxu0 0
        %1096 = vmatpush1.bf16.xpose.msra.mxu0 0
        %1097 = vmatprep.subr.bf16.mxu0 0
        %1098 = vmatpush1.bf16.xpose.msra.mxu0 0
        %1099 = vmatprep.subr.bf16.mxu0 0
        %1100 = vmatpush1.bf16.xpose.msra.mxu0 0
        %1101 = vmatprep.subr.bf16.mxu0 0
        %1102 = vmatpush1.bf16.xpose.msra.mxu0 0
        %1103 = vmatprep.mubr.bf16.mxu0 0
        %1104 = vmatmul.mubr.bf16.gmra.mrb[0].mxu0 %v1066
        %v1105 = vpop.f32.mrb[0].mxu0
        %v1106 = vadd.f32 0.0, %v1105
        %v1107 = vpop.f32.mrb[0].mxu0
        %v1108 = vpop.f32.mrb[0].mxu0
        %v1109 = vpop.f32.mrb[0].mxu0
        %1110 = vdwg.mxu0
        %vm1111 = vcmask 64512
        %v1112 = vsel %vm1111, %v1060, -inf
        %1113 = vmax.xlane.f32.xlu0 %v1112
        %v1114 = vpop.xlane.xlu0 %1113
        %v1115 = vsub.f32 %v1060, %v1114
        %v1116 = vmul.f32 %v1115, 1.442695
        %v1117 = vpow.pop %v1116
        %v1118 = vsel %vm1111, %v1117, 0.0
        %1119 = vadd.xlane.f32.xlu0 %v1118
        %v1120 = vpop.xlane.xlu0 %1119
        %v1121 = vrcp.pop %v1120
        %v1122 = vmul.f32 %v1117, %v1121
        %s1123 = sld [smem:[#allocation10 + %s39]]
        %v1124 = vsel %vm1111, %v1106, -inf
        %1125 = vmax.xlane.f32.xlu0 %v1124
        %v1126 = vpop.xlane.xlu0 %1125
        %v1127 = vsub.f32 %v1106, %v1126
        %v1128 = vmul.f32 %v1127, 1.442695
        %v1129 = vpow.pop %v1128
        %v1130 = vsel %vm1111, %v1129, 0.0
        %1131 = vadd.xlane.f32.xlu0 %v1130
        %v1132 = vpop.xlane.xlu0 %1131
        %v1133 = vrcp.pop %v1132
        %v1134 = vmul.f32 %v1129, %v1133
        %v1135 = vstv %s1123
        %v1136 = vmul.f32 %v1135, %v1134
        %v1137 = vsub.f32 %v1122, %v1136
        %v1138 = vpack.c.bf16 %v1137, %v1137
        %v1140 = vsel %vm1111, %v1138, 0
        %vm1142 = vcmask 1043456
        %v1144 = vsel %vm1142, %v1018, 0
        %1146 = vmatprep.subr.bf16.mxu0 0
        %1147 = vmatpush1.bf16.msra.mxu0 %v1144
        %1148 = vmatprep.subr.bf16.mxu0 0
        %1149 = vmatpush1.bf16.msra.mxu0 0
        %1150 = vmatprep.subr.bf16.mxu0 0
        %1151 = vmatpush1.bf16.msra.mxu0 0
        %1152 = vmatprep.subr.bf16.mxu0 0
        %1153 = vmatpush1.bf16.msra.mxu0 0
        %1154 = vmatprep.subr.bf16.mxu0 0
        %1155 = vmatpush1.bf16.msra.mxu0 0
        %1156 = vmatprep.subr.bf16.mxu0 0
        %1157 = vmatpush1.bf16.msra.mxu0 0
        %1158 = vmatprep.subr.bf16.mxu0 0
        %1159 = vmatpush1.bf16.msra.mxu0 0
        %1160 = vmatprep.subr.bf16.mxu0 0
        %1161 = vmatpush1.bf16.msra.mxu0 0
        %1162 = vmatprep.subr.bf16.mxu0 0
        %1163 = vmatpush1.bf16.msra.mxu0 0
        %1164 = vmatprep.subr.bf16.mxu0 0
        %1165 = vmatpush1.bf16.msra.mxu0 0
        %1166 = vmatprep.subr.bf16.mxu0 0
        %1167 = vmatpush1.bf16.msra.mxu0 0
        %1168 = vmatprep.subr.bf16.mxu0 0
        %1169 = vmatpush1.bf16.msra.mxu0 0
        %1170 = vmatprep.subr.bf16.mxu0 0
        %1171 = vmatpush1.bf16.msra.mxu0 0
        %1172 = vmatprep.subr.bf16.mxu0 0
        %1173 = vmatpush1.bf16.msra.mxu0 0
        %1174 = vmatprep.subr.bf16.mxu0 0
        %1175 = vmatpush1.bf16.msra.mxu0 0
        %1176 = vmatprep.subr.bf16.mxu0 0
        %1177 = vmatpush1.bf16.msra.mxu0 0
        %1178 = vmatprep.mubr.bf16.mxu0 0
        %1179 = vmatmul.mubr.bf16.gmra.mrb[0].mxu0 %v1140
        %v1180 = vpop.f32.mrb[0].mxu0
        %v1181 = vadd.f32 0.0, %v1180
        %v1182 = vpop.f32.mrb[0].mxu0
        %v1183 = vpop.f32.mrb[0].mxu0
        %v1184 = vpop.f32.mrb[0].mxu0
        %1185 = vdwg.mxu0
        %v1186 = vadd.f32 %v725, %v1181
        %v1187 = vld [vmem:[%s699] sm:$0x1]
        %v1188 = vld [vmem:[%s597] sm:$0x1]
        %v1189 = vsel %vm743, %v1186, 0.0
        %1190 = vadd.xlane.f32.xlu0 %v1189
        %v1191 = vpop.xlane.xlu0 %1190
        %v1192 = vrcp.pop 32.0
        %v1193 = vmul.f32 %v1191, %v1192
        %v1194 = vsub.f32 %v1186, %v1193
        %v1195 = vmul.f32 %v1194, %v1194
        %v1196 = vsel %vm743, %v1195, 0.0
        %1197 = vadd.xlane.f32.xlu0 %v1196
        %v1198 = vpop.xlane.xlu0 %1197
        %v1199 = vmul.f32 %v1198, %v1192
        %v1200 = vadd.f32 %v1199, 1e-05
        %v1201 = vrsqrt.pop %v1200
        %v1202 = vmul.f32 %v1194, %v1201
        %v1204 = vlaneseq
        %v1205 = vshrl.u32 %v1204, 7
        %v1206 = vsub.s32 0, %v1205
        %v1207 = vrot.slane %v1187, %v1206
        %v1209 = vmul.f32 %v1202, %v1207
        %v1211 = vlaneseq
        %v1212 = vshrl.u32 %v1211, 7
        %v1213 = vsub.s32 0, %v1212
        %v1214 = vrot.slane %v1188, %v1213
        %v1216 = vadd.f32 %v1209, %v1214
        %v1217 = vpack.c.bf16 %v1216, %v1216
        %v1218 = vld [vmem:[%s606] sm:$0xf]
        %v1219 = vld [vmem:[%s606 + $0x4] sm:$0xf]
        %v1220 = vld [vmem:[%s606 + $0x8] sm:$0xf]
        %v1221 = vld [vmem:[%s606 + $0xc] sm:$0xf]
        %v1222 = vld [vmem:[%s702] sm:$0x1]
        %v1224 = vlaneseq
        %v1225 = vshrl.u32 %v1224, 7
        %v1226 = vsub.s32 0, %v1225
        %v1227 = vrot.slane %v1222, %v1226
        %v1233 = vunpack.c.l.b16 %v1218
        %v1234 = vunpack.c.l.b16 %v1219
        %v1235 = vunpack.c.l.b16 %v1220
        %v1236 = vunpack.c.l.b16 %v1221
        %v1237 = vpack.c.b16 %v1234, %v1233
        %v1238 = vpack.c.b16 %v1236, %v1235
        %v1242 = vsel %vm743, %v1217, 0
        %1244 = vmatprep.subr.bf16.mxu0 0
        %1245 = vmatpush1.bf16.msra.mxu0 %v1237
        %1246 = vmatprep.subr.bf16.mxu0 0
        %1247 = vmatpush1.bf16.msra.mxu0 %v1238
        %1248 = vmatprep.subr.bf16.mxu0 0
        %1249 = vmatpush1.bf16.msra.mxu0 0
        %1250 = vmatprep.subr.bf16.mxu0 0
        %1251 = vmatpush1.bf16.msra.mxu0 0
        %1252 = vmatprep.subr.bf16.mxu0 0
        %1253 = vmatpush1.bf16.msra.mxu0 0
        %1254 = vmatprep.subr.bf16.mxu0 0
        %1255 = vmatpush1.bf16.msra.mxu0 0
        %1256 = vmatprep.subr.bf16.mxu0 0
        %1257 = vmatpush1.bf16.msra.mxu0 0
        %1258 = vmatprep.subr.bf16.mxu0 0
        %1259 = vmatpush1.bf16.msra.mxu0 0
        %1260 = vmatprep.subr.bf16.mxu0 0
        %1261 = vmatpush1.bf16.msra.mxu0 0
        %1262 = vmatprep.subr.bf16.mxu0 0
        %1263 = vmatpush1.bf16.msra.mxu0 0
        %1264 = vmatprep.subr.bf16.mxu0 0
        %1265 = vmatpush1.bf16.msra.mxu0 0
        %1266 = vmatprep.subr.bf16.mxu0 0
        %1267 = vmatpush1.bf16.msra.mxu0 0
        %1268 = vmatprep.subr.bf16.mxu0 0
        %1269 = vmatpush1.bf16.msra.mxu0 0
        %1270 = vmatprep.subr.bf16.mxu0 0
        %1271 = vmatpush1.bf16.msra.mxu0 0
        %1272 = vmatprep.subr.bf16.mxu0 0
        %1273 = vmatpush1.bf16.msra.mxu0 0
        %1274 = vmatprep.subr.bf16.mxu0 0
        %1275 = vmatpush1.bf16.msra.mxu0 0
        %1276 = vmatprep.mubr.bf16.mxu0 0
        %1277 = vmatmul.mubr.bf16.gmra.mrb[0].mxu0 %v1242
        %v1278 = vpop.f32.mrb[0].mxu0
        %v1279 = vadd.f32 %v1227, %v1278
        %v1280 = vpop.f32.mrb[0].mxu0
        %v1281 = vpop.f32.mrb[0].mxu0
        %v1282 = vpop.f32.mrb[0].mxu0
        %1283 = vdwg.mxu0
        %v1284 = vmax.f32 %v1279, 0.0
        %v1285 = vpack.c.bf16 %v1284, %v1284
        %v1286 = vld [vmem:[%s707] sm:$0xf]
        %v1287 = vld [vmem:[%s707 + $0x4] sm:$0xf]
        %v1288 = vld [vmem:[%s707 + $0x8] sm:$0xf]
        %v1289 = vld [vmem:[%s707 + $0xc] sm:$0xf]
        %v1290 = vld [vmem:[%s707 + $0x10] sm:$0xf]
        %v1291 = vld [vmem:[%s707 + $0x14] sm:$0xf]
        %v1292 = vld [vmem:[%s707 + $0x18] sm:$0xf]
        %v1293 = vld [vmem:[%s707 + $0x1c] sm:$0xf]
        %v1294 = vld [vmem:[%s707 + $0x20] sm:$0xf]
        %v1295 = vld [vmem:[%s707 + $0x24] sm:$0xf]
        %v1296 = vld [vmem:[%s707 + $0x28] sm:$0xf]
        %v1297 = vld [vmem:[%s707 + $0x2c] sm:$0xf]
        %v1298 = vld [vmem:[%s707 + $0x30] sm:$0xf]
        %v1299 = vld [vmem:[%s707 + $0x34] sm:$0xf]
        %v1300 = vld [vmem:[%s707 + $0x38] sm:$0xf]
        %v1301 = vld [vmem:[%s707 + $0x3c] sm:$0xf]
        %v1302 = vld [vmem:[%s710] sm:$0x1]
        %v1304 = vlaneseq
        %v1305 = vshrl.u32 %v1304, 7
        %v1306 = vsub.s32 0, %v1305
        %v1307 = vrot.slane %v1302, %v1306
        %v1325 = vunpack.c.l.b16 %v1286
        %v1326 = vunpack.c.l.b16 %v1287
        %v1327 = vunpack.c.l.b16 %v1288
        %v1328 = vunpack.c.l.b16 %v1289
        %v1329 = vunpack.c.l.b16 %v1290
        %v1330 = vunpack.c.l.b16 %v1291
        %v1331 = vunpack.c.l.b16 %v1292
        %v1332 = vunpack.c.l.b16 %v1293
        %v1333 = vunpack.c.l.b16 %v1294
        %v1334 = vunpack.c.l.b16 %v1295
        %v1335 = vunpack.c.l.b16 %v1296
        %v1336 = vunpack.c.l.b16 %v1297
        %v1337 = vunpack.c.l.b16 %v1298
        %v1338 = vunpack.c.l.b16 %v1299
        %v1339 = vunpack.c.l.b16 %v1300
        %v1340 = vunpack.c.l.b16 %v1301
        %v1341 = vpack.c.b16 %v1326, %v1325
        %v1342 = vpack.c.b16 %v1328, %v1327
        %v1343 = vpack.c.b16 %v1330, %v1329
        %v1344 = vpack.c.b16 %v1332, %v1331
        %v1345 = vpack.c.b16 %v1334, %v1333
        %v1346 = vpack.c.b16 %v1336, %v1335
        %v1347 = vpack.c.b16 %v1338, %v1337
        %v1348 = vpack.c.b16 %v1340, %v1339
        %1357 = vmatprep.subr.bf16.mxu0 0
        %1358 = vmatpush1.bf16.msra.mxu0 %v1341
        %1359 = vmatprep.subr.bf16.mxu0 0
        %1360 = vmatpush1.bf16.msra.mxu0 %v1342
        %1361 = vmatprep.subr.bf16.mxu0 0
        %1362 = vmatpush1.bf16.msra.mxu0 %v1343
        %1363 = vmatprep.subr.bf16.mxu0 0
        %1364 = vmatpush1.bf16.msra.mxu0 %v1344
        %1365 = vmatprep.subr.bf16.mxu0 0
        %1366 = vmatpush1.bf16.msra.mxu0 %v1345
        %1367 = vmatprep.subr.bf16.mxu0 0
        %1368 = vmatpush1.bf16.msra.mxu0 %v1346
        %1369 = vmatprep.subr.bf16.mxu0 0
        %1370 = vmatpush1.bf16.msra.mxu0 %v1347
        %1371 = vmatprep.subr.bf16.mxu0 0
        %1372 = vmatpush1.bf16.msra.mxu0 %v1348
        %1373 = vmatprep.subr.bf16.mxu0 0
        %1374 = vmatpush1.bf16.msra.mxu0 0
        %1375 = vmatprep.subr.bf16.mxu0 0
        %1376 = vmatpush1.bf16.msra.mxu0 0
        %1377 = vmatprep.subr.bf16.mxu0 0
        %1378 = vmatpush1.bf16.msra.mxu0 0
        %1379 = vmatprep.subr.bf16.mxu0 0
        %1380 = vmatpush1.bf16.msra.mxu0 0
        %1381 = vmatprep.subr.bf16.mxu0 0
        %1382 = vmatpush1.bf16.msra.mxu0 0
        %1383 = vmatprep.subr.bf16.mxu0 0
        %1384 = vmatpush1.bf16.msra.mxu0 0
        %1385 = vmatprep.subr.bf16.mxu0 0
        %1386 = vmatpush1.bf16.msra.mxu0 0
        %1387 = vmatprep.subr.bf16.mxu0 0
        %1388 = vmatpush1.bf16.msra.mxu0 0
        %1389 = vmatprep.mubr.bf16.mxu0 0
        %1390 = vmatmul.mubr.bf16.gmra.mrb[0].mxu0 %v1285
        %v1391 = vpop.f32.mrb[0].mxu0
        %v1392 = vadd.f32 %v1307, %v1391
        %v1393 = vpop.f32.mrb[0].mxu0
        %v1394 = vpop.f32.mrb[0].mxu0
        %v1395 = vpop.f32.mrb[0].mxu0
        %1396 = vdwg.mxu0
        %v1397 = vadd.f32 %v1216, %v1392
        %v1398 = vld [vmem:[%s713] sm:$0x1]
        %v1399 = vld [vmem:[%s716] sm:$0x1]
        %v1400 = vsel %vm743, %v1397, 0.0
        %1401 = vadd.xlane.f32.xlu0 %v1400
        %v1402 = vpop.xlane.xlu0 %1401
        %v1403 = vmul.f32 %v1402, %v1192
        %v1404 = vsub.f32 %v1397, %v1403
        %v1405 = vmul.f32 %v1404, %v1404
        %v1406 = vsel %vm743, %v1405, 0.0
        %1407 = vadd.xlane.f32.xlu0 %v1406
        %v1408 = vpop.xlane.xlu0 %1407
        %v1409 = vmul.f32 %v1408, %v1192
        %v1410 = vadd.f32 %v1409, 1e-05
        %v1411 = vrsqrt.pop %v1410
        %v1412 = vmul.f32 %v1404, %v1411
        %v1414 = vlaneseq
        %v1415 = vshrl.u32 %v1414, 7
        %v1416 = vsub.s32 0, %v1415
        %v1417 = vrot.slane %v1398, %v1416
        %v1419 = vmul.f32 %v1412, %v1417
        %v1421 = vlaneseq
        %v1422 = vshrl.u32 %v1421, 7
        %v1423 = vsub.s32 0, %v1422
        %v1424 = vrot.slane %v1399, %v1423
        %v1426 = vadd.f32 %v1419, %v1424
        %1427 = vst.msk [vmem:[#allocation2] sm:$0xff] %vm743, %v1426
        %p1428 = scmp.eq.s32.totalorder %s39, 1
        // Predicated region
        $region97: #{tpu_custom_call.1} parent=75 // pred_check
          %p1429 = pneg %p1428
        $region98: #{tpu_custom_call.1} parent=75 // pred_check_branch
          %1431 = sbr.rel (%p1429) target = $region100
        $region99: #{tpu_custom_call.1} parent=75 // pred_region
          %1432 = vst.msk [vmem:[#allocation12] sm:$0xff] %vm743, %v1426
          %v1433 = vpack.c.bf16 %v1426, %v1426
          %v1434 = vld [vmem:[%s11] sm:$0xf]
          %v1435 = vld [vmem:[%s11 + $0x4] sm:$0xf]
          %v1436 = vld [vmem:[%s11 + $0x8] sm:$0xf]
          %v1437 = vld [vmem:[%s11 + $0xc] sm:$0xf]
          %v1438 = vld [vmem:[%s12] sm:$0x1]
          %v1440 = vlaneseq
          %v1441 = vshrl.u32 %v1440, 7
          %v1442 = vsub.s32 0, %v1441
          %v1443 = vrot.slane %v1438, %v1442
          %v1449 = vunpack.c.l.b16 %v1434
          %v1450 = vunpack.c.l.b16 %v1435
          %v1451 = vunpack.c.l.b16 %v1436
          %v1452 = vunpack.c.l.b16 %v1437
          %v1453 = vpack.c.b16 %v1450, %v1449
          %v1454 = vpack.c.b16 %v1452, %v1451
          %v1458 = vsel %vm743, %v1433, 0
          %1460 = vmatprep.subr.bf16.mxu0 0
          %1461 = vmatpush1.bf16.msra.mxu0 %v1453
          %1462 = vmatprep.subr.bf16.mxu0 0
          %1463 = vmatpush1.bf16.msra.mxu0 %v1454
          %1464 = vmatprep.subr.bf16.mxu0 0
          %1465 = vmatpush1.bf16.msra.mxu0 0
          %1466 = vmatprep.subr.bf16.mxu0 0
          %1467 = vmatpush1.bf16.msra.mxu0 0
          %1468 = vmatprep.subr.bf16.mxu0 0
          %1469 = vmatpush1.bf16.msra.mxu0 0
          %1470 = vmatprep.subr.bf16.mxu0 0
          %1471 = vmatpush1.bf16.msra.mxu0 0
          %1472 = vmatprep.subr.bf16.mxu0 0
          %1473 = vmatpush1.bf16.msra.mxu0 0
          %1474 = vmatprep.subr.bf16.mxu0 0
          %1475 = vmatpush1.bf16.msra.mxu0 0
          %1476 = vmatprep.subr.bf16.mxu0 0
          %1477 = vmatpush1.bf16.msra.mxu0 0
          %1478 = vmatprep.subr.bf16.mxu0 0
          %1479 = vmatpush1.bf16.msra.mxu0 0
          %1480 = vmatprep.subr.bf16.mxu0 0
          %1481 = vmatpush1.bf16.msra.mxu0 0
          %1482 = vmatprep.subr.bf16.mxu0 0
          %1483 = vmatpush1.bf16.msra.mxu0 0
          %1484 = vmatprep.subr.bf16.mxu0 0
          %1485 = vmatpush1.bf16.msra.mxu0 0
          %1486 = vmatprep.subr.bf16.mxu0 0
          %1487 = vmatpush1.bf16.msra.mxu0 0
          %1488 = vmatprep.subr.bf16.mxu0 0
          %1489 = vmatpush1.bf16.msra.mxu0 0
          %1490 = vmatprep.subr.bf16.mxu0 0
          %1491 = vmatpush1.bf16.msra.mxu0 0
          %1492 = vmatprep.mubr.bf16.mxu0 0
          %1493 = vmatmul.mubr.bf16.gmra.mrb[0].mxu0 %v1458
          %v1494 = vpop.f32.mrb[0].mxu0
          %v1495 = vadd.f32 %v1443, %v1494
          %v1496 = vpop.f32.mrb[0].mxu0
          %v1497 = vpop.f32.mrb[0].mxu0
          %v1498 = vpop.f32.mrb[0].mxu0
          %1499 = vdwg.mxu0
          %1500 = vmax.xlane.f32.xlu0 %v1495
          %v1501 = vpop.xlane.xlu0 %1500
          %v1502 = vsub.f32 %v1495, %v1501
          %v1503 = vmul.f32 %v1502, 1.442695
          %v1504 = vpow.pop %v1503
          %1505 = vadd.xlane.f32.xlu0 %v1504
          %v1506 = vpop.xlane.xlu0 %1505
          %v1507 = vrcp.pop %v1506
          %v1508 = vmul.f32 %v1504, %v1507
          %1509 = vst [vmem:[#allocation11] sm:$0xff] %v1508
        $region100: #{tpu_custom_call.1} parent=75 // pred_fallthru
          _
        // Predicated region
        $region101: #{tpu_custom_call.1} parent=75 // pred_check
          %p1510 = pneg %p413
        $region102: #{tpu_custom_call.1} parent=75 // pred_check_branch
          %1512 = sbr.rel (%p1510) target = $region104
        $region103: #{tpu_custom_call.1} parent=75 // pred_region
          %s1514 = ssub.s32 128, 128
          %1515 = vsyncadd [#allocation5], %s1514
          %s1516 = smul.addr %s38, 128
          %s1517 = scalar_lea.hbm %s14, %s1516
          %s1519 = sshll.u32 [#allocation11], 4
          %s1520 = int_to_ptr.vmem [resolvable:$true] %s1519
          %1522 = dma.vmem_to_hbm [thread:$0]  %s1520, 128, %s1517, [#allocation5]
        $region104: #{tpu_custom_call.1} parent=75 // pred_fallthru
          _
        // Predicated region
        $region105: #{tpu_custom_call.1} parent=75 // pred_check
          %p1523 = pneg %p439
        $region106: #{tpu_custom_call.1} parent=75 // pred_check_branch
          %1525 = sbr.rel (%p1523) target = $region108
        $region107: #{tpu_custom_call.1} parent=75 // pred_region
          %s1527 = ssub.s32 128, 128
          %1528 = vsyncadd [#allocation13], %s1527
          %s1529 = smul.addr %s38, 128
          %s1530 = scalar_lea.hbm %s15, %s1529
          %s1532 = sshll.u32 [#allocation12], 4
          %s1533 = int_to_ptr.vmem [resolvable:$true] %s1532
          %1535 = dma.vmem_to_hbm [thread:$0]  %s1533, 128, %s1530, [#allocation13]
        $region108: #{tpu_custom_call.1} parent=75 // pred_fallthru
          _
        // Predicated region
        $region109: #{tpu_custom_call.1} parent=75 // pred_check
          %p1536 = pneg %p413
        $region110: #{tpu_custom_call.1} parent=75 // pred_check_branch
          %1538 = sbr.rel (%p1536) target = $region112
        $region111: #{tpu_custom_call.1} parent=75 // pred_region
          %1539 = dma.done [#allocation5], 128
        $region112: #{tpu_custom_call.1} parent=75 // pred_fallthru
          _
        // Predicated region
        $region113: #{tpu_custom_call.1} parent=75 // pred_check
          %p1540 = pneg %p439
        $region114: #{tpu_custom_call.1} parent=75 // pred_check_branch
          %1542 = sbr.rel (%p1540) target = $region116
        $region115: #{tpu_custom_call.1} parent=75 // pred_region
          %1543 = dma.done [#allocation13], 128
        $region116: #{tpu_custom_call.1} parent=75 // pred_fallthru
          _
      $region76: #{tpu_custom_call.1} parent=5 // pred_fallthru
        _
      %p1544 = scmp.le.s32.totalorder 2, %s29
      // Predicated region
      $region117: #{tpu_custom_call.1} parent=5 // pred_check
        %p1545 = pneg %p1544
      $region118: #{tpu_custom_call.1} parent=5 // pred_check_branch
        %1547 = sbr.rel (%p1545) target = $region120
      $region119: #{tpu_custom_call.1} parent=5 // pred_region
        %s1548 = ssub.s32 %s29, 2
      $region120: #{tpu_custom_call.1} parent=5 // pred_fallthru
        _
    $region6: #{tpu_custom_call.1} parent=1 // loop_footer
      %s33 = sadd.s32 1, %s29
    $region7: #{tpu_custom_call.1} parent=1 // loop_footer_branch
      %28 = sbr.rel target = $region3
    $region8: #{tpu_custom_call.1} parent=1 // loop_exit
      _
    %1549 = vsyncpa [#allocation4], 1
    %s1550 = scalar_lea.sflag [#allocation4], 1
    %1551 = vsyncpa %s1550, 1
    %1552 = vsyncpa [#allocation8], 1
    %s1553 = scalar_lea.sflag [#allocation8], 1
    %1554 = vsyncpa %s1553, 1
    %1555 = vsyncpa [#allocation5], 1
    %s1556 = scalar_lea.sflag [#allocation5], 1
    %1557 = vsyncpa %s1556, 1
    %1558 = vsyncpa [#allocation13], 1
    %1559 = vsyncpa [#allocation6], 1
    %s1560 = scalar_lea.sflag [#allocation6], 1
    %1561 = vsyncpa %s1560, 1

</llo_original>
